<compile_context>
chip_gen: v6e
topology: v6e:2x2x1
jax: 0.10.0
libtpu: 0.0.40
codegen_flags: <defaults>
</compile_context>

<pallas_src>
import functools

import jax
import jax.numpy as jnp
from jax.experimental import pallas as pl
from jax.experimental.pallas import tpu as pltpu


# ----------------------------------------------------------------------------
# Kernel: fused 4-layer MLP (+ReLU) + LayerNorm on one row tile.
# Weights are bf16 (MXU-native), all accumulation / normalization in f32.
# ----------------------------------------------------------------------------
def _mlp_ln_kernel(x_ref,        # (row_tile, F)   input rows (f32)
                   w_in_ref,     # (F, H)          first-layer weight (bf16)
                   w_hid_ref,    # (3, H, H)       layers 2..4 weights (bf16)
                   b_ref,        # (6, H)          b1..b4, gamma, beta (f32)
                   o_ref):       # (row_tile, H)
    # hoist bias / LN params once (static slices, no per-use re-select)
    b1 = b_ref[0:1, :]
    b2 = b_ref[1:2, :]
    b3 = b_ref[2:3, :]
    b4 = b_ref[3:4, :]
    gamma = b_ref[4:5, :]
    beta = b_ref[5:6, :]

    x = x_ref[...]

    h = jnp.dot(x.astype(jnp.bfloat16), w_in_ref[...],
                preferred_element_type=jnp.float32) + b1
    h = jnp.maximum(h, 0.0)
    h = jnp.dot(h.astype(jnp.bfloat16), w_hid_ref[0],
                preferred_element_type=jnp.float32) + b2
    h = jnp.maximum(h, 0.0)
    h = jnp.dot(h.astype(jnp.bfloat16), w_hid_ref[1],
                preferred_element_type=jnp.float32) + b3
    h = jnp.maximum(h, 0.0)
    h = jnp.dot(h.astype(jnp.bfloat16), w_hid_ref[2],
                preferred_element_type=jnp.float32) + b4

    # LayerNorm over last dim (biased variance, eps=1e-5, torch semantics)
    mean = jnp.mean(h, axis=-1, keepdims=True)
    c = h - mean
    var = jnp.mean(c * c, axis=-1, keepdims=True)
    y = c * jax.lax.rsqrt(var + 1e-5) * gamma + beta

    o_ref[...] = y.astype(o_ref.dtype)


def _choose_row_tile(n_rows, requested):
    """Multiple-of-8 row tile, >=2 tiles per call so both v7x TCs get work."""
    requested = max(8, (requested // 8) * 8)
    if n_rows <= 8:
        return 8
    half = (((n_rows + 1) // 2) + 7) // 8 * 8
    return min(requested, max(8, half))


def _mlp_layernorm_call(x, w_in, w_hid, b_all, row_tile):
    """One pallas_call: rows of x -> MLP(+ReLU) -> LayerNorm."""
    n_rows, f_in = x.shape
    F, H = w_in.shape
    if f_in != F:                                   # only pad if shapes differ
        x = jnp.pad(x, ((0, 0), (0, F - f_in)))

    tile = _choose_row_tile(n_rows, row_tile)
    num_tiles = pl.cdiv(n_rows, tile)

    flops = 2 * n_rows * (F * H + 3 * H * H)
    bytes_accessed = (x.size * x.dtype.itemsize
                      + w_in.size * 2 + w_hid.size * 2 + b_all.size * 4
                      + n_rows * H * x.dtype.itemsize)
    cost = pl.CostEstimate(flops=int(flops),
                           transcendentals=int(n_rows),
                           bytes_accessed=int(bytes_accessed))

    return pl.pallas_call(
        _mlp_ln_kernel,
        out_shape=jax.ShapeDtypeStruct((n_rows, H), x.dtype),
        grid=(num_tiles,),
        in_specs=[
            pl.BlockSpec((tile, F), lambda i: (i, 0)),        # stream rows
            pl.BlockSpec((F, H), lambda i: (0, 0)),           # resident weights
            pl.BlockSpec((3, H, H), lambda i: (0, 0, 0)),     # resident weights
            pl.BlockSpec((6, H), lambda i: (0, 0)),           # resident biases
        ],
        out_specs=pl.BlockSpec((tile, H), lambda i: (i, 0)),
        compiler_params=pltpu.CompilerParams(
            dimension_semantics=("parallel",)),
        cost_estimate=cost,
    )(x, w_in, w_hid, b_all)


@functools.partial(jax.jit, static_argnames=("row_tile",))
def encoder_forward(node_attr, edge_attr, node_packed, edge_packed,
                    *, row_tile=1024):
    node_out = _mlp_layernorm_call(node_attr, *node_packed, row_tile)
    edge_out = _mlp_layernorm_call(edge_attr, *edge_packed, row_tile)
    return node_out, edge_out


# ----------------------------------------------------------------------------
# Parameter construction (deterministic synthetic init, torch-like).
# ----------------------------------------------------------------------------
def init_mlp_params(key, in_size, hidden_size, dtype=jnp.float32):
    """build_mlp(in, hid, hid) + LayerNorm params (weights pre-transposed)."""
    ks = jax.random.split(key, 8)

    def lin(kw, kb, fan_in, fan_out):
        bound = 1.0 / (fan_in ** 0.5)
        w = jax.random.uniform(kw, (fan_in, fan_out), dtype, -bound, bound)
        b = jax.random.uniform(kb, (fan_out,), dtype, -bound, bound)
        return w, b

    w1, b1 = lin(ks[0], ks[1], in_size, hidden_size)
    w2, b2 = lin(ks[2], ks[3], hidden_size, hidden_size)
    w3, b3 = lin(ks[4], ks[5], hidden_size, hidden_size)
    w4, b4 = lin(ks[6], ks[7], hidden_size, hidden_size)
    gamma = jnp.ones((hidden_size,), dtype)   # torch LayerNorm init
    beta = jnp.zeros((hidden_size,), dtype)
    return (w1, b1, w2, b2, w3, b3, w4, b4, gamma, beta)


def pack_encoder_params(params):
    """Stack one encoder's params: bf16 weights for the MXU, f32 bias/LN."""
    w1, b1, w2, b2, w3, b3, w4, b4, g, beta = params
    w_in = w1.astype(jnp.bfloat16)                                # (F, H)
    w_hid = jnp.stack([w2, w3, w4]).astype(jnp.bfloat16)          # (3, H, H)
    b_all = jnp.stack([b1, b2, b3, b4, g, beta]).astype(jnp.float32)  # (6, H)
    return w_in, w_hid, b_all


class Encoder:
    """JAX/Pallas Encoder: node-MLP + edge-MLP (each with LayerNorm)."""

    def __init__(self, key, edge_input_size=128, node_input_size=128,
                 hidden_size=128, row_tile=1024):
        k_eb, k_nb = jax.random.split(key)
        self.eb_params = init_mlp_params(k_eb, edge_input_size, hidden_size)
        self.nb_params = init_mlp_params(k_nb, node_input_size, hidden_size)
        self.eb_packed = pack_encoder_params(self.eb_params)
        self.nb_packed = pack_encoder_params(self.nb_params)
        self.row_tile = row_tile

    def __call__(self, node_attr, edge_attr, edge_index):
        node_, edge_ = encoder_forward(node_attr, edge_attr,
                                       self.nb_packed, self.eb_packed,
                                       row_tile=self.row_tile)
        # analogue of Data(x=node_, edge_attr=edge_, edge_index=edge_index)
        return {"x": node_, "edge_attr": edge_, "edge_index": edge_index}


# ----------------------------------------------------------------------------
# Pure-JAX reference (same bf16-operand / f32-accumulate matmul semantics).
# ----------------------------------------------------------------------------
def _reference(x, params):
    w1, b1, w2, b2, w3, b3, w4, b4, g, beta = params

    def mm(a, w):
        return jnp.dot(a.astype(jnp.bfloat16), w.astype(jnp.bfloat16),
                       preferred_element_type=jnp.float32)

    h = jnp.maximum(mm(x, w1) + b1, 0.0)
    h = jnp.maximum(mm(h, w2) + b2, 0.0)
    h = jnp.maximum(mm(h, w3) + b3, 0.0)
    h = mm(h, w4) + b4
    mean = jnp.mean(h, -1, keepdims=True)
    var = jnp.mean((h - mean) ** 2, -1, keepdims=True)
    return (h - mean) * jax.lax.rsqrt(var + 1e-5) * g + beta


if __name__ == "__main__":
    key = jax.random.PRNGKey(0)
    k_model, k_node, k_edge = jax.random.split(key, 3)

    # shapes follow the module defaults: feature/hidden size 128 (lane-dense)
    NODE_IN = EDGE_IN = HIDDEN = 128
    N_NODES, N_EDGES = 128, 256

    node_attr = jax.random.normal(k_node, (N_NODES, NODE_IN), jnp.float32)
    edge_attr = jax.random.normal(k_edge, (N_EDGES, EDGE_IN), jnp.float32)
    edge_index = jnp.stack([jnp.arange(N_EDGES) % N_NODES,
                            (jnp.arange(N_EDGES) + 1) % N_NODES]).astype(jnp.int32)

    enc = Encoder(k_model, edge_input_size=EDGE_IN,
                  node_input_size=NODE_IN, hidden_size=HIDDEN)
    out = enc(node_attr, edge_attr, edge_index)
    jax.block_until_ready(out)

    # sanity check against pure-JAX reference (bf16-matmul, f32-accumulate)
    ref_node = _reference(node_attr, enc.nb_params)
    ref_edge = _reference(edge_attr, enc.eb_params)
    assert jnp.allclose(out["x"], ref_node, atol=1e-2, rtol=1e-2)
    assert jnp.allclose(out["edge_attr"], ref_edge, atol=1e-2, rtol=1e-2)
    assert not jnp.any(jnp.isnan(out["x"])) and not jnp.any(jnp.isnan(out["edge_attr"]))

    print("KERNEL_OK")
</pallas_src>

<mosaic_0001>
module attributes {stable_mosaic.version = 11 : i64} {
  func.func @_mlp_ln_kernel(%arg0: i32, %arg1: memref<128x128xf32, #tpu.memory_space<vmem>>, %arg2: memref<128x128xbf16, #tpu.memory_space<vmem>>, %arg3: memref<3x128x128xbf16, #tpu.memory_space<vmem>>, %arg4: memref<6x128xf32, #tpu.memory_space<vmem>>, %arg5: memref<128x128xf32, #tpu.memory_space<vmem>>) attributes {dimension_semantics = [#tpu.dimension_semantics<parallel>], iteration_bounds = array<i64: 2>, scalar_prefetch = 0 : i64, scratch_operands = 0 : i64, tpu.core_type = #tpu.core_type<tc>, window_params = [{transform_indices = @transform_0, window_bounds = array<i64: 128, 128>}, {pipeline_mode = #tpu.pipeline_mode<synchronous>, transform_indices = @transform_1, window_bounds = array<i64: 128, 128>}, {pipeline_mode = #tpu.pipeline_mode<synchronous>, transform_indices = @transform_2, window_bounds = array<i64: 3, 128, 128>}, {pipeline_mode = #tpu.pipeline_mode<synchronous>, transform_indices = @transform_3, window_bounds = array<i64: 6, 128>}, {transform_indices = @transform_4, window_bounds = array<i64: 128, 128>}]} {
    %c0 = arith.constant 0 : index
    %c0_0 = arith.constant 0 : index
    %0 = vector.load %arg4[%c0, %c0_0] : memref<6x128xf32, #tpu.memory_space<vmem>>, vector<1x128xf32>
    %c1 = arith.constant 1 : index
    %c0_1 = arith.constant 0 : index
    %1 = vector.load %arg4[%c1, %c0_1] : memref<6x128xf32, #tpu.memory_space<vmem>>, vector<1x128xf32>
    %c2 = arith.constant 2 : index
    %c0_2 = arith.constant 0 : index
    %2 = vector.load %arg4[%c2, %c0_2] : memref<6x128xf32, #tpu.memory_space<vmem>>, vector<1x128xf32>
    %c3 = arith.constant 3 : index
    %c0_3 = arith.constant 0 : index
    %3 = vector.load %arg4[%c3, %c0_3] : memref<6x128xf32, #tpu.memory_space<vmem>>, vector<1x128xf32>
    %c4 = arith.constant 4 : index
    %c0_4 = arith.constant 0 : index
    %4 = vector.load %arg4[%c4, %c0_4] : memref<6x128xf32, #tpu.memory_space<vmem>>, vector<1x128xf32>
    %c5 = arith.constant 5 : index
    %c0_5 = arith.constant 0 : index
    %5 = vector.load %arg4[%c5, %c0_5] : memref<6x128xf32, #tpu.memory_space<vmem>>, vector<1x128xf32>
    %c0_6 = arith.constant 0 : index
    %c0_7 = arith.constant 0 : index
    %6 = vector.load %arg1[%c0_6, %c0_7] : memref<128x128xf32, #tpu.memory_space<vmem>>, vector<128x128xf32>
    %7 = arith.truncf %6 : vector<128x128xf32> to vector<128x128xbf16>
    %c0_8 = arith.constant 0 : index
    %c0_9 = arith.constant 0 : index
    %8 = vector.load %arg2[%c0_8, %c0_9] : memref<128x128xbf16, #tpu.memory_space<vmem>>, vector<128x128xbf16>
    %cst = arith.constant dense<0.000000e+00> : vector<128x128xf32>
    %9 = tpu.matmul %7, %8, %cst {dimension_numbers = #tpu.dot_dimension_numbers<[1], [0], [0], [1], [0, 0, 1, 1], [], []>} : vector<128x128xbf16>, vector<128x128xbf16>, vector<128x128xf32> -> vector<128x128xf32>
    %10 = vector.broadcast %0 : vector<1x128xf32> to vector<128x128xf32>
    %11 = arith.addf %9, %10 : vector<128x128xf32>
    %cst_10 = arith.constant 0.000000e+00 : f32
    %12 = vector.broadcast %cst_10 : f32 to vector<128x128xf32>
    %13 = arith.maximumf %11, %12 : vector<128x128xf32>
    %14 = arith.truncf %13 : vector<128x128xf32> to vector<128x128xbf16>
    %c0_11 = arith.constant 0 : index
    %c0_12 = arith.constant 0 : index
    %c0_13 = arith.constant 0 : index
    %15 = vector.load %arg3[%c0_11, %c0_12, %c0_13] : memref<3x128x128xbf16, #tpu.memory_space<vmem>>, vector<1x128x128xbf16>
    %16 = vector.shape_cast %15 : vector<1x128x128xbf16> to vector<128x128xbf16>
    %cst_14 = arith.constant dense<0.000000e+00> : vector<128x128xf32>
    %17 = tpu.matmul %14, %16, %cst_14 {dimension_numbers = #tpu.dot_dimension_numbers<[1], [0], [0], [1], [0, 0, 1, 1], [], []>} : vector<128x128xbf16>, vector<128x128xbf16>, vector<128x128xf32> -> vector<128x128xf32>
    %18 = vector.broadcast %1 : vector<1x128xf32> to vector<128x128xf32>
    %19 = arith.addf %17, %18 : vector<128x128xf32>
    %cst_15 = arith.constant 0.000000e+00 : f32
    %20 = vector.broadcast %cst_15 : f32 to vector<128x128xf32>
    %21 = arith.maximumf %19, %20 : vector<128x128xf32>
    %22 = arith.truncf %21 : vector<128x128xf32> to vector<128x128xbf16>
    %c1_16 = arith.constant 1 : index
    %c0_17 = arith.constant 0 : index
    %c0_18 = arith.constant 0 : index
    %23 = vector.load %arg3[%c1_16, %c0_17, %c0_18] : memref<3x128x128xbf16, #tpu.memory_space<vmem>>, vector<1x128x128xbf16>
    %24 = vector.shape_cast %23 : vector<1x128x128xbf16> to vector<128x128xbf16>
    %cst_19 = arith.constant dense<0.000000e+00> : vector<128x128xf32>
    %25 = tpu.matmul %22, %24, %cst_19 {dimension_numbers = #tpu.dot_dimension_numbers<[1], [0], [0], [1], [0, 0, 1, 1], [], []>} : vector<128x128xbf16>, vector<128x128xbf16>, vector<128x128xf32> -> vector<128x128xf32>
    %26 = vector.broadcast %2 : vector<1x128xf32> to vector<128x128xf32>
    %27 = arith.addf %25, %26 : vector<128x128xf32>
    %cst_20 = arith.constant 0.000000e+00 : f32
    %28 = vector.broadcast %cst_20 : f32 to vector<128x128xf32>
    %29 = arith.maximumf %27, %28 : vector<128x128xf32>
    %30 = arith.truncf %29 : vector<128x128xf32> to vector<128x128xbf16>
    %c2_21 = arith.constant 2 : index
    %c0_22 = arith.constant 0 : index
    %c0_23 = arith.constant 0 : index
    %31 = vector.load %arg3[%c2_21, %c0_22, %c0_23] : memref<3x128x128xbf16, #tpu.memory_space<vmem>>, vector<1x128x128xbf16>
    %32 = vector.shape_cast %31 : vector<1x128x128xbf16> to vector<128x128xbf16>
    %cst_24 = arith.constant dense<0.000000e+00> : vector<128x128xf32>
    %33 = tpu.matmul %30, %32, %cst_24 {dimension_numbers = #tpu.dot_dimension_numbers<[1], [0], [0], [1], [0, 0, 1, 1], [], []>} : vector<128x128xbf16>, vector<128x128xbf16>, vector<128x128xf32> -> vector<128x128xf32>
    %34 = vector.broadcast %3 : vector<1x128xf32> to vector<128x128xf32>
    %35 = arith.addf %33, %34 : vector<128x128xf32>
    %cst_25 = arith.constant dense<0.000000e+00> : vector<128xf32>
    %36 = vector.multi_reduction <add>, %35, %cst_25 [1] : vector<128x128xf32> to vector<128xf32>
    %37 = vector.shape_cast %36 : vector<128xf32> to vector<128x1xf32>
    %cst_26 = arith.constant 1.280000e+02 : f32
    %38 = vector.broadcast %cst_26 : f32 to vector<128x1xf32>
    %39 = arith.divf %37, %38 : vector<128x1xf32>
    %40 = vector.broadcast %39 : vector<128x1xf32> to vector<128x128xf32>
    %41 = arith.subf %35, %40 : vector<128x128xf32>
    %42 = arith.mulf %41, %41 : vector<128x128xf32>
    %cst_27 = arith.constant dense<0.000000e+00> : vector<128xf32>
    %43 = vector.multi_reduction <add>, %42, %cst_27 [1] : vector<128x128xf32> to vector<128xf32>
    %44 = vector.shape_cast %43 : vector<128xf32> to vector<128x1xf32>
    %cst_28 = arith.constant 1.280000e+02 : f32
    %45 = vector.broadcast %cst_28 : f32 to vector<128x1xf32>
    %46 = arith.divf %44, %45 : vector<128x1xf32>
    %cst_29 = arith.constant 9.99999974E-6 : f32
    %47 = vector.broadcast %cst_29 : f32 to vector<128x1xf32>
    %48 = arith.addf %46, %47 : vector<128x1xf32>
    %49 = math.rsqrt %48 : vector<128x1xf32>
    %50 = vector.broadcast %49 : vector<128x1xf32> to vector<128x128xf32>
    %51 = arith.mulf %41, %50 : vector<128x128xf32>
    %52 = vector.broadcast %4 : vector<1x128xf32> to vector<128x128xf32>
    %53 = arith.mulf %51, %52 : vector<128x128xf32>
    %54 = vector.broadcast %5 : vector<1x128xf32> to vector<128x128xf32>
    %55 = arith.addf %53, %54 : vector<128x128xf32>
    %c0_30 = arith.constant 0 : index
    %c0_31 = arith.constant 0 : index
    %56 = vector.load %arg5[%c0_30, %c0_31] : memref<128x128xf32, #tpu.memory_space<vmem>>, vector<128x128xf32>
    tpu.vector_store %arg5[%c0_30, %c0_31], %55 {strides = array<i32>} : memref<128x128xf32, #tpu.memory_space<vmem>>, vector<128x128xf32>,
    return
  }
  func.func @transform_0(%arg0: i32) -> (i32, i32) {
    %c0_i32 = arith.constant 0 : i32
    %c0_i32_0 = arith.constant 0 : i32
    return %arg0, %c0_i32 : i32, i32
  }
  func.func @transform_1(%arg0: i32) -> (i32, i32) {
    %c0_i32 = arith.constant 0 : i32
    %c0_i32_0 = arith.constant 0 : i32
    %c0_i32_1 = arith.constant 0 : i32
    return %c0_i32, %c0_i32_0 : i32, i32
  }
  func.func @transform_2(%arg0: i32) -> (i32, i32, i32) {
    %c0_i32 = arith.constant 0 : i32
    %c0_i32_0 = arith.constant 0 : i32
    %c0_i32_1 = arith.constant 0 : i32
    %c0_i32_2 = arith.constant 0 : i32
    return %c0_i32, %c0_i32_0, %c0_i32_1 : i32, i32, i32
  }
  func.func @transform_3(%arg0: i32) -> (i32, i32) {
    %c0_i32 = arith.constant 0 : i32
    %c0_i32_0 = arith.constant 0 : i32
    %c0_i32_1 = arith.constant 0 : i32
    return %c0_i32, %c0_i32_0 : i32, i32
  }
  func.func @transform_4(%arg0: i32) -> (i32, i32) {
    %c0_i32 = arith.constant 0 : i32
    %c0_i32_0 = arith.constant 0 : i32
    return %arg0, %c0_i32 : i32, i32
  }
}

module attributes {stable_mosaic.version = 11 : i64} {
  func.func @_mlp_ln_kernel(%arg0: i32, %arg1: memref<64x128xf32, #tpu.memory_space<vmem>>, %arg2: memref<128x128xbf16, #tpu.memory_space<vmem>>, %arg3: memref<3x128x128xbf16, #tpu.memory_space<vmem>>, %arg4: memref<6x128xf32, #tpu.memory_space<vmem>>, %arg5: memref<64x128xf32, #tpu.memory_space<vmem>>) attributes {dimension_semantics = [#tpu.dimension_semantics<parallel>], iteration_bounds = array<i64: 2>, scalar_prefetch = 0 : i64, scratch_operands = 0 : i64, tpu.core_type = #tpu.core_type<tc>, window_params = [{transform_indices = @transform_0, window_bounds = array<i64: 64, 128>}, {pipeline_mode = #tpu.pipeline_mode<synchronous>, transform_indices = @transform_1, window_bounds = array<i64: 128, 128>}, {pipeline_mode = #tpu.pipeline_mode<synchronous>, transform_indices = @transform_2, window_bounds = array<i64: 3, 128, 128>}, {pipeline_mode = #tpu.pipeline_mode<synchronous>, transform_indices = @transform_3, window_bounds = array<i64: 6, 128>}, {transform_indices = @transform_4, window_bounds = array<i64: 64, 128>}]} {
    %c0 = arith.constant 0 : index
    %c0_0 = arith.constant 0 : index
    %0 = vector.load %arg4[%c0, %c0_0] : memref<6x128xf32, #tpu.memory_space<vmem>>, vector<1x128xf32>
    %c1 = arith.constant 1 : index
    %c0_1 = arith.constant 0 : index
    %1 = vector.load %arg4[%c1, %c0_1] : memref<6x128xf32, #tpu.memory_space<vmem>>, vector<1x128xf32>
    %c2 = arith.constant 2 : index
    %c0_2 = arith.constant 0 : index
    %2 = vector.load %arg4[%c2, %c0_2] : memref<6x128xf32, #tpu.memory_space<vmem>>, vector<1x128xf32>
    %c3 = arith.constant 3 : index
    %c0_3 = arith.constant 0 : index
    %3 = vector.load %arg4[%c3, %c0_3] : memref<6x128xf32, #tpu.memory_space<vmem>>, vector<1x128xf32>
    %c4 = arith.constant 4 : index
    %c0_4 = arith.constant 0 : index
    %4 = vector.load %arg4[%c4, %c0_4] : memref<6x128xf32, #tpu.memory_space<vmem>>, vector<1x128xf32>
    %c5 = arith.constant 5 : index
    %c0_5 = arith.constant 0 : index
    %5 = vector.load %arg4[%c5, %c0_5] : memref<6x128xf32, #tpu.memory_space<vmem>>, vector<1x128xf32>
    %c0_6 = arith.constant 0 : index
    %c0_7 = arith.constant 0 : index
    %6 = vector.load %arg1[%c0_6, %c0_7] : memref<64x128xf32, #tpu.memory_space<vmem>>, vector<64x128xf32>
    %7 = arith.truncf %6 : vector<64x128xf32> to vector<64x128xbf16>
    %c0_8 = arith.constant 0 : index
    %c0_9 = arith.constant 0 : index
    %8 = vector.load %arg2[%c0_8, %c0_9] : memref<128x128xbf16, #tpu.memory_space<vmem>>, vector<128x128xbf16>
    %cst = arith.constant dense<0.000000e+00> : vector<64x128xf32>
    %9 = tpu.matmul %7, %8, %cst {dimension_numbers = #tpu.dot_dimension_numbers<[1], [0], [0], [1], [0, 0, 1, 1], [], []>} : vector<64x128xbf16>, vector<128x128xbf16>, vector<64x128xf32> -> vector<64x128xf32>
    %10 = vector.broadcast %0 : vector<1x128xf32> to vector<64x128xf32>
    %11 = arith.addf %9, %10 : vector<64x128xf32>
    %cst_10 = arith.constant 0.000000e+00 : f32
    %12 = vector.broadcast %cst_10 : f32 to vector<64x128xf32>
    %13 = arith.maximumf %11, %12 : vector<64x128xf32>
    %14 = arith.truncf %13 : vector<64x128xf32> to vector<64x128xbf16>
    %c0_11 = arith.constant 0 : index
    %c0_12 = arith.constant 0 : index
    %c0_13 = arith.constant 0 : index
    %15 = vector.load %arg3[%c0_11, %c0_12, %c0_13] : memref<3x128x128xbf16, #tpu.memory_space<vmem>>, vector<1x128x128xbf16>
    %16 = vector.shape_cast %15 : vector<1x128x128xbf16> to vector<128x128xbf16>
    %cst_14 = arith.constant dense<0.000000e+00> : vector<64x128xf32>
    %17 = tpu.matmul %14, %16, %cst_14 {dimension_numbers = #tpu.dot_dimension_numbers<[1], [0], [0], [1], [0, 0, 1, 1], [], []>} : vector<64x128xbf16>, vector<128x128xbf16>, vector<64x128xf32> -> vector<64x128xf32>
    %18 = vector.broadcast %1 : vector<1x128xf32> to vector<64x128xf32>
    %19 = arith.addf %17, %18 : vector<64x128xf32>
    %cst_15 = arith.constant 0.000000e+00 : f32
    %20 = vector.broadcast %cst_15 : f32 to vector<64x128xf32>
    %21 = arith.maximumf %19, %20 : vector<64x128xf32>
    %22 = arith.truncf %21 : vector<64x128xf32> to vector<64x128xbf16>
    %c1_16 = arith.constant 1 : index
    %c0_17 = arith.constant 0 : index
    %c0_18 = arith.constant 0 : index
    %23 = vector.load %arg3[%c1_16, %c0_17, %c0_18] : memref<3x128x128xbf16, #tpu.memory_space<vmem>>, vector<1x128x128xbf16>
    %24 = vector.shape_cast %23 : vector<1x128x128xbf16> to vector<128x128xbf16>
    %cst_19 = arith.constant dense<0.000000e+00> : vector<64x128xf32>
    %25 = tpu.matmul %22, %24, %cst_19 {dimension_numbers = #tpu.dot_dimension_numbers<[1], [0], [0], [1], [0, 0, 1, 1], [], []>} : vector<64x128xbf16>, vector<128x128xbf16>, vector<64x128xf32> -> vector<64x128xf32>
    %26 = vector.broadcast %2 : vector<1x128xf32> to vector<64x128xf32>
    %27 = arith.addf %25, %26 : vector<64x128xf32>
    %cst_20 = arith.constant 0.000000e+00 : f32
    %28 = vector.broadcast %cst_20 : f32 to vector<64x128xf32>
    %29 = arith.maximumf %27, %28 : vector<64x128xf32>
    %30 = arith.truncf %29 : vector<64x128xf32> to vector<64x128xbf16>
    %c2_21 = arith.constant 2 : index
    %c0_22 = arith.constant 0 : index
    %c0_23 = arith.constant 0 : index
    %31 = vector.load %arg3[%c2_21, %c0_22, %c0_23] : memref<3x128x128xbf16, #tpu.memory_space<vmem>>, vector<1x128x128xbf16>
    %32 = vector.shape_cast %31 : vector<1x128x128xbf16> to vector<128x128xbf16>
    %cst_24 = arith.constant dense<0.000000e+00> : vector<64x128xf32>
    %33 = tpu.matmul %30, %32, %cst_24 {dimension_numbers = #tpu.dot_dimension_numbers<[1], [0], [0], [1], [0, 0, 1, 1], [], []>} : vector<64x128xbf16>, vector<128x128xbf16>, vector<64x128xf32> -> vector<64x128xf32>
    %34 = vector.broadcast %3 : vector<1x128xf32> to vector<64x128xf32>
    %35 = arith.addf %33, %34 : vector<64x128xf32>
    %cst_25 = arith.constant dense<0.000000e+00> : vector<64xf32>
    %36 = vector.multi_reduction <add>, %35, %cst_25 [1] : vector<64x128xf32> to vector<64xf32>
    %37 = vector.shape_cast %36 : vector<64xf32> to vector<64x1xf32>
    %cst_26 = arith.constant 1.280000e+02 : f32
    %38 = vector.broadcast %cst_26 : f32 to vector<64x1xf32>
    %39 = arith.divf %37, %38 : vector<64x1xf32>
    %40 = vector.broadcast %39 : vector<64x1xf32> to vector<64x128xf32>
    %41 = arith.subf %35, %40 : vector<64x128xf32>
    %42 = arith.mulf %41, %41 : vector<64x128xf32>
    %cst_27 = arith.constant dense<0.000000e+00> : vector<64xf32>
    %43 = vector.multi_reduction <add>, %42, %cst_27 [1] : vector<64x128xf32> to vector<64xf32>
    %44 = vector.shape_cast %43 : vector<64xf32> to vector<64x1xf32>
    %cst_28 = arith.constant 1.280000e+02 : f32
    %45 = vector.broadcast %cst_28 : f32 to vector<64x1xf32>
    %46 = arith.divf %44, %45 : vector<64x1xf32>
    %cst_29 = arith.constant 9.99999974E-6 : f32
    %47 = vector.broadcast %cst_29 : f32 to vector<64x1xf32>
    %48 = arith.addf %46, %47 : vector<64x1xf32>
    %49 = math.rsqrt %48 : vector<64x1xf32>
    %50 = vector.broadcast %49 : vector<64x1xf32> to vector<64x128xf32>
    %51 = arith.mulf %41, %50 : vector<64x128xf32>
    %52 = vector.broadcast %4 : vector<1x128xf32> to vector<64x128xf32>
    %53 = arith.mulf %51, %52 : vector<64x128xf32>
    %54 = vector.broadcast %5 : vector<1x128xf32> to vector<64x128xf32>
    %55 = arith.addf %53, %54 : vector<64x128xf32>
    %c0_30 = arith.constant 0 : index
    %c0_31 = arith.constant 0 : index
    %56 = vector.load %arg5[%c0_30, %c0_31] : memref<64x128xf32, #tpu.memory_space<vmem>>, vector<64x128xf32>
    tpu.vector_store %arg5[%c0_30, %c0_31], %55 {strides = array<i32>} : memref<64x128xf32, #tpu.memory_space<vmem>>, vector<64x128xf32>,
    return
  }
  func.func @transform_0(%arg0: i32) -> (i32, i32) {
    %c0_i32 = arith.constant 0 : i32
    %c0_i32_0 = arith.constant 0 : i32
    return %arg0, %c0_i32 : i32, i32
  }
  func.func @transform_1(%arg0: i32) -> (i32, i32) {
    %c0_i32 = arith.constant 0 : i32
    %c0_i32_0 = arith.constant 0 : i32
    %c0_i32_1 = arith.constant 0 : i32
    return %c0_i32, %c0_i32_0 : i32, i32
  }
  func.func @transform_2(%arg0: i32) -> (i32, i32, i32) {
    %c0_i32 = arith.constant 0 : i32
    %c0_i32_0 = arith.constant 0 : i32
    %c0_i32_1 = arith.constant 0 : i32
    %c0_i32_2 = arith.constant 0 : i32
    return %c0_i32, %c0_i32_0, %c0_i32_1 : i32, i32, i32
  }
  func.func @transform_3(%arg0: i32) -> (i32, i32) {
    %c0_i32 = arith.constant 0 : i32
    %c0_i32_0 = arith.constant 0 : i32
    %c0_i32_1 = arith.constant 0 : i32
    return %c0_i32, %c0_i32_0 : i32, i32
  }
  func.func @transform_4(%arg0: i32) -> (i32, i32) {
    %c0_i32 = arith.constant 0 : i32
    %c0_i32_0 = arith.constant 0 : i32
    return %arg0, %c0_i32 : i32, i32
  }
}

</mosaic_0001>

<llo_original>
// kernel: encoder_forward.2
$region0: #{encoder_forward.2}
  #allocation0 [shape = 'u32[]', space=smem, size = 0x4, offset = 0x4, fixed_abs, tag = 'smem constant byte address 0x4 - core index']
  #allocation1 [shape = 'u32[144,128]{1,0:T(1,128)}', space=vmem, size = 0x12000, scoped, tag = 'internal scratch']
  %s0 = inlined_call_operand.hbm [shape: f32[128,128], index: 0, kind: input, shape index: {}]
  %s1 = inlined_call_operand.hbm [shape: bf16[128,128], index: 1, kind: input, shape index: {}]
  %s2 = inlined_call_operand.hbm [shape: bf16[3,128,128], index: 2, kind: input, shape index: {}]
  %s3 = inlined_call_operand.hbm [shape: f32[6,128], index: 3, kind: input, shape index: {}]
  %s4 = inlined_call_operand.hbm [shape: f32[128,128], index: 4, kind: output, shape index: {}]
  %s5 = sld [smem:[#allocation0]]
  $region65: #{encoder_forward.2} parent=0
    _
  %s7 = ssub.s32 1, %s5
  %s8 = scalar_select 0, %s7, %s5
  $region1: #{encoder_forward.2} parent=0
    #allocation2 [shape = 'u8[65536]{0}', space=vmem, size = 0x10000, scoped, tag = 'input window, operand 0']
    #allocation3 [shape = 's32[2]{0}', space=sflag, size = 0x8, scoped, tag = 'scoped memory for encoder_forward.2']
    #allocation4 [shape = 's32[2]{0}', space=sflag, size = 0x8, scoped, tag = 'scoped memory for encoder_forward.2']
    #allocation5 [shape = 'u8[32768]{0}', space=vmem, size = 0x8000, scoped, tag = 'input window, operand 1, single buffered']
    #allocation6 [shape = 's32[1]{0}', space=sflag, size = 0x4, scoped, tag = 'scoped memory for encoder_forward.2']
    #allocation7 [shape = 'u8[98304]{0}', space=vmem, size = 0x18000, scoped, tag = 'input window, operand 2, single buffered']
    #allocation8 [shape = 'u8[4096]{0}', space=vmem, size = 0x1000, scoped, tag = 'input window, operand 3, single buffered']
    #allocation9 [shape = 's32[1]{0}', space=sflag, size = 0x4, scoped, tag = 'scoped memory for encoder_forward.2']
    #allocation10 [shape = 'u8[65536]{0}', space=vmem, size = 0x10000, scoped, tag = 'output window, operand 0']
    %9 = vsyncpa [#allocation3], 0
    %s10 = scalar_lea.sflag [#allocation3], 1
    %11 = vsyncpa %s10, 0
    %12 = vsyncpa [#allocation6], 0
    %13 = vsyncpa [#allocation9], 0
    %14 = vsyncpa [#allocation4], 0
    %s15 = scalar_lea.sflag [#allocation4], 1
    %16 = vsyncpa %s15, 0
    loop: start=0, step=1, limit=4
    $region2: #{encoder_forward.2} parent=1 // loop_pre_header
      _
    $region3: #{encoder_forward.2} parent=1 // loop_header
      %s18 = sphi 0, %s22
      %p19 = scmp.ge.s32.totalorder %s18, 4
      %s28 = sphi 0, %s30
      %s31 = sphi 0, %s28
      %s32 = sphi 0, %s31
      %s48 = sphi 0, %s32
      %s52 = sphi 0, %s52
      %s54 = sphi 0, %s52
      %s55 = sphi 0, %s54
      %s69 = sphi 0, %s55
      %s73 = sphi 0, %s73
      %s75 = sphi 0, %s73
      %s76 = sphi 0, %s75
      %s90 = sphi 0, %s76
      %s94 = sphi 0, %s94
      %s96 = sphi 0, %s94
      %s97 = sphi 0, %s96
      %s111 = sphi 0, %s97
      %s117 = sphi 0, %s119
      %s120 = sphi 0, %s117
      %s121 = sphi 0, %s120
      %s137 = sphi 0, %s121
    $region4: #{encoder_forward.2} parent=1 // loop_header_branch
      %21 = sbr.rel (%p19) target = $region8
    $region5: #{encoder_forward.2} parent=1 // loop_body
      %s23 = ssub.s32 %s18, 1
      %s24 = ssub.s32 %s18, 2
      %s25 = sadd.s32 %s18, 1
      %s26 = ssub.s32 %s18, %s25
      %p27 = scmp.eq.s32.totalorder %s26, 0
      %s29 = sadd.s32 %s28, 1
      %s30 = scalar_select %p27, %s28, %s29
      %p33 = pneg %p27
      %p34 = scmp.eq.s32.totalorder %s18, 1
      %p35 = por %p33, %p34
      %p36 = scmp.ne.s32.totalorder %s28, %s31
      %p37 = scmp.eq.s32.totalorder %s18, 0
      %p38 = por %p36, %p37
      %p39 = scmp.ne.s32.totalorder %s28, %s31
      %p40 = scmp.eq.s32.totalorder %s23, 1
      %p41 = por %p39, %p40
      %p42 = scmp.ne.s32.totalorder %s31, %s32
      %p43 = scmp.eq.s32.totalorder %s23, 0
      %p44 = por %p42, %p43
      %p45 = scmp.ne.s32.totalorder %s31, %s32
      %p46 = scmp.eq.s32.totalorder %s24, 1
      %p47 = por %p45, %p46
      %p49 = scmp.ne.s32.totalorder %s32, %s48
      %p50 = scmp.eq.s32.totalorder %s24, 0
      %p51 = por %p49, %p50
      %s53 = sadd.s32 %s52, 1
      %p56 = scmp.eq.s32.totalorder %s18, 1
      %p57 = scmp.ne.s32.totalorder %s52, %s54
      %p58 = scmp.eq.s32.totalorder %s18, 0
      %p59 = por %p57, %p58
      %p60 = scmp.ne.s32.totalorder %s52, %s54
      %p61 = scmp.eq.s32.totalorder %s23, 1
      %p62 = por %p60, %p61
      %p63 = scmp.ne.s32.totalorder %s54, %s55
      %p64 = scmp.eq.s32.totalorder %s23, 0
      %p65 = por %p63, %p64
      %p66 = scmp.ne.s32.totalorder %s54, %s55
      %p67 = scmp.eq.s32.totalorder %s24, 1
      %p68 = por %p66, %p67
      %p70 = scmp.ne.s32.totalorder %s55, %s69
      %p71 = scmp.eq.s32.totalorder %s24, 0
      %p72 = por %p70, %p71
      %s74 = sadd.s32 %s73, 1
      %p77 = scmp.eq.s32.totalorder %s18, 1
      %p78 = scmp.ne.s32.totalorder %s73, %s75
      %p79 = scmp.eq.s32.totalorder %s18, 0
      %p80 = por %p78, %p79
      %p81 = scmp.ne.s32.totalorder %s73, %s75
      %p82 = scmp.eq.s32.totalorder %s23, 1
      %p83 = por %p81, %p82
      %p84 = scmp.ne.s32.totalorder %s75, %s76
      %p85 = scmp.eq.s32.totalorder %s23, 0
      %p86 = por %p84, %p85
      %p87 = scmp.ne.s32.totalorder %s75, %s76
      %p88 = scmp.eq.s32.totalorder %s24, 1
      %p89 = por %p87, %p88
      %p91 = scmp.ne.s32.totalorder %s76, %s90
      %p92 = scmp.eq.s32.totalorder %s24, 0
      %p93 = por %p91, %p92
      %s95 = sadd.s32 %s94, 1
      %p98 = scmp.eq.s32.totalorder %s18, 1
      %p99 = scmp.ne.s32.totalorder %s94, %s96
      %p100 = scmp.eq.s32.totalorder %s18, 0
      %p101 = por %p99, %p100
      %p102 = scmp.ne.s32.totalorder %s94, %s96
      %p103 = scmp.eq.s32.totalorder %s23, 1
      %p104 = por %p102, %p103
      %p105 = scmp.ne.s32.totalorder %s96, %s97
      %p106 = scmp.eq.s32.totalorder %s23, 0
      %p107 = por %p105, %p106
      %p108 = scmp.ne.s32.totalorder %s96, %s97
      %p109 = scmp.eq.s32.totalorder %s24, 1
      %p110 = por %p108, %p109
      %p112 = scmp.ne.s32.totalorder %s97, %s111
      %p113 = scmp.eq.s32.totalorder %s24, 0
      %p114 = por %p112, %p113
      %s115 = ssub.s32 %s18, %s25
      %p116 = scmp.eq.s32.totalorder %s115, 0
      %s118 = sadd.s32 %s117, 1
      %s119 = scalar_select %p116, %s117, %s118
      %p122 = pneg %p116
      %p123 = scmp.eq.s32.totalorder %s18, 1
      %p124 = por %p122, %p123
      %p125 = scmp.ne.s32.totalorder %s117, %s120
      %p126 = scmp.eq.s32.totalorder %s18, 0
      %p127 = por %p125, %p126
      %p128 = scmp.ne.s32.totalorder %s117, %s120
      %p129 = scmp.eq.s32.totalorder %s23, 1
      %p130 = por %p128, %p129
      %p131 = scmp.ne.s32.totalorder %s120, %s121
      %p132 = scmp.eq.s32.totalorder %s23, 0
      %p133 = por %p131, %p132
      %p134 = scmp.ne.s32.totalorder %s120, %s121
      %p135 = scmp.eq.s32.totalorder %s24, 1
      %p136 = por %p134, %p135
      %p138 = scmp.ne.s32.totalorder %s121, %s137
      %p139 = scmp.eq.s32.totalorder %s24, 0
      %p140 = por %p138, %p139
      %p141 = scmp.le.s32.totalorder 1, %s18
      %p142 = scmp.lt.s32.totalorder %s18, 3
      %p143 = pnand %p141, %p142
      %p144 = pneg %p143
      // Predicated region
      $region9: #{encoder_forward.2} parent=5 // pred_check
        _
      $region10: #{encoder_forward.2} parent=5 // pred_check_branch
        %146 = sbr.rel (%p143) target = $region12
      $region11: #{encoder_forward.2} parent=5 // pred_region
        %s147 = ssub.s32 %s18, 1
        // Predicated region
        $region13: #{encoder_forward.2} parent=11 // pred_check
          %p148 = pneg %p65
        $region14: #{encoder_forward.2} parent=11 // pred_check_branch
          %150 = sbr.rel (%p148) target = $region16
        $region15: #{encoder_forward.2} parent=11 // pred_region
          %s152 = ssub.s32 1024, 1024
          %153 = vsyncadd [#allocation6], %s152
          %s154 = sshll.u32 [#allocation5], 4
          %s155 = int_to_ptr.vmem [resolvable:$true] %s154
          %160 = dma.hbm_to_vmem [thread:$0]  %s1, 1024, %s155, [#allocation6], 64, 64, 4
        $region16: #{encoder_forward.2} parent=11 // pred_fallthru
          _
        // Predicated region
        $region17: #{encoder_forward.2} parent=11 // pred_check
          %p161 = pneg %p86
        $region18: #{encoder_forward.2} parent=11 // pred_check_branch
          %163 = sbr.rel (%p161) target = $region20
        $region19: #{encoder_forward.2} parent=11 // pred_region
          %s165 = ssub.s32 3072, 3072
          %166 = vsyncadd [#allocation6], %s165
          %s167 = sshll.u32 [#allocation7], 4
          %s168 = int_to_ptr.vmem [resolvable:$true] %s167
          %173 = dma.hbm_to_vmem [thread:$0]  %s2, 3072, %s168, [#allocation6], 64, 64, 4
        $region20: #{encoder_forward.2} parent=11 // pred_fallthru
          _
        // Predicated region
        $region21: #{encoder_forward.2} parent=11 // pred_check
          %p174 = pneg %p107
        $region22: #{encoder_forward.2} parent=11 // pred_check_branch
          %176 = sbr.rel (%p174) target = $region24
        $region23: #{encoder_forward.2} parent=11 // pred_region
          %s178 = ssub.s32 128, 128
          %179 = vsyncadd [#allocation9], %s178
          %s181 = sshll.u32 [#allocation8], 4
          %s182 = int_to_ptr.vmem [resolvable:$true] %s181
          %184 = dma.hbm_to_vmem [thread:$0]  %s3, 128, %s182, [#allocation9]
        $region24: #{encoder_forward.2} parent=11 // pred_fallthru
          _
      $region12: #{encoder_forward.2} parent=5 // pred_fallthru
        _
      %p185 = scmp.lt.s32.totalorder %s18, 2
      // Predicated region
      $region25: #{encoder_forward.2} parent=5 // pred_check
        %p186 = pneg %p185
      $region26: #{encoder_forward.2} parent=5 // pred_check_branch
        %188 = sbr.rel (%p186) target = $region28
      $region27: #{encoder_forward.2} parent=5 // pred_region
        // Predicated region
        $region29: #{encoder_forward.2} parent=27 // pred_check
          %p189 = pneg %p38
        $region30: #{encoder_forward.2} parent=27 // pred_check_branch
          %191 = sbr.rel (%p189) target = $region32
        $region31: #{encoder_forward.2} parent=27 // pred_region
          %s192 = sand.u32 %s28, 1
          %s193 = scalar_lea.sflag [#allocation3], %s192
          %s194 = sand.u32 %s28, 1
          %s195 = smul.addr %s194, 64
          %s196 = scalar_lea.vmem [#allocation2], %s195
          %s197 = smul.u32 8, %s18
          %s199 = ssub.s32 1024, 1024
          %200 = vsyncadd %s193, %s199
          %s201 = smul.addr %s197, 128
          %s202 = scalar_lea.hbm %s0, %s201
          %s203 = sshll.u32 %s196, 4
          %s204 = int_to_ptr.vmem [resolvable:$true] %s203
          %209 = dma.hbm_to_vmem [thread:$0]  %s202, 1024, %s204, %s193, 128, 128, 8
        $region32: #{encoder_forward.2} parent=27 // pred_fallthru
          _
      $region28: #{encoder_forward.2} parent=5 // pred_fallthru
        _
      %p210 = scmp.le.s32.totalorder 1, %s18
      %p211 = scmp.lt.s32.totalorder %s18, 3
      %p212 = pnand %p210, %p211
      %p213 = pneg %p212
      // Predicated region
      $region33: #{encoder_forward.2} parent=5 // pred_check
        _
      $region34: #{encoder_forward.2} parent=5 // pred_check_branch
        %215 = sbr.rel (%p212) target = $region36
      $region35: #{encoder_forward.2} parent=5 // pred_region
        %s216 = ssub.s32 %s18, 1
        %s217 = sand.u32 %s31, 1
        %s218 = scalar_lea.sflag [#allocation3], %s217
        %s219 = sand.u32 %s31, 1
        %s220 = smul.addr %s219, 64
        %s221 = scalar_lea.vmem [#allocation2], %s220
        // Predicated region
        $region37: #{encoder_forward.2} parent=35 // pred_check
          %p222 = pneg %p44
        $region38: #{encoder_forward.2} parent=35 // pred_check_branch
          %224 = sbr.rel (%p222) target = $region40
        $region39: #{encoder_forward.2} parent=35 // pred_region
          %225 = dma.done %s218, 1024
        $region40: #{encoder_forward.2} parent=35 // pred_fallthru
          _
        // Predicated region
        $region41: #{encoder_forward.2} parent=35 // pred_check
          %p226 = pneg %p65
        $region42: #{encoder_forward.2} parent=35 // pred_check_branch
          %228 = sbr.rel (%p226) target = $region44
        $region43: #{encoder_forward.2} parent=35 // pred_region
          %229 = dma.done [#allocation6], 1024
        $region44: #{encoder_forward.2} parent=35 // pred_fallthru
          _
        // Predicated region
        $region45: #{encoder_forward.2} parent=35 // pred_check
          %p230 = pneg %p86
        $region46: #{encoder_forward.2} parent=35 // pred_check_branch
          %232 = sbr.rel (%p230) target = $region48
        $region47: #{encoder_forward.2} parent=35 // pred_region
          %233 = dma.done [#allocation6], 3072
        $region48: #{encoder_forward.2} parent=35 // pred_fallthru
          _
        // Predicated region
        $region49: #{encoder_forward.2} parent=35 // pred_check
          %p234 = pneg %p107
        $region50: #{encoder_forward.2} parent=35 // pred_check_branch
          %236 = sbr.rel (%p234) target = $region52
        $region51: #{encoder_forward.2} parent=35 // pred_region
          %237 = dma.done [#allocation9], 128
        $region52: #{encoder_forward.2} parent=35 // pred_fallthru
          _
        %s238 = sand.u32 %s31, 1
        %s239 = scalar_lea.sflag [#allocation3], %s238
        %s240 = sand.u32 %s31, 1
        %s241 = smul.addr %s240, 64
        %s242 = scalar_lea.vmem [#allocation2], %s241
        %p243 = pneg %p44
        %p244 = pneg %p41
        %p245 = pneg %p65
        %p246 = pneg %p62
        %p247 = pneg %p86
        %p248 = pneg %p83
        %p249 = pneg %p107
        %p250 = pneg %p104
        %p251 = pneg %p133
        %p252 = pneg %p130
        %s253 = sand.u32 %s120, 1
        %s254 = scalar_lea.sflag [#allocation4], %s253
        %s255 = sand.u32 %s120, 1
        %s256 = smul.addr %s255, 64
        %s257 = scalar_lea.vmem [#allocation10], %s256
        %s258 = smul.u32 8, %s23
        %s259 = smul.u32 8, %s23
        %v261 = vld [vmem:[#allocation8] sm:$0x1]
        %v262 = vld [vmem:[#allocation8 + $0x1] sm:$0x1]
        %v263 = vld [vmem:[#allocation8 + $0x2] sm:$0x1]
        %v264 = vld [vmem:[#allocation8 + $0x3] sm:$0x1]
        %v265 = vld [vmem:[#allocation8 + $0x4] sm:$0x1]
        %v266 = vld [vmem:[#allocation8 + $0x5] sm:$0x1]
        %v267 = vld [vmem:[%s221] sm:$0xff]
        %v268 = vld [vmem:[%s221 + $0x8] sm:$0xff]
        %v269 = vld [vmem:[%s221 + $0x10] sm:$0xff]
        %v270 = vld [vmem:[%s221 + $0x18] sm:$0xff]
        %v271 = vld [vmem:[%s221 + $0x20] sm:$0xff]
        %v272 = vld [vmem:[%s221 + $0x28] sm:$0xff]
        %v273 = vld [vmem:[%s221 + $0x30] sm:$0xff]
        %v274 = vld [vmem:[%s221 + $0x38] sm:$0xff]
        %v275 = vpack.c.bf16 %v268, %v267
        %v276 = vpack.c.bf16 %v270, %v269
        %v277 = vpack.c.bf16 %v272, %v271
        %v278 = vpack.c.bf16 %v274, %v273
        %v279 = vld [vmem:[#allocation5] sm:$0xf]
        %v280 = vld [vmem:[#allocation5 + $0x4] sm:$0xf]
        %v281 = vld [vmem:[#allocation5 + $0x8] sm:$0xf]
        %v282 = vld [vmem:[#allocation5 + $0xc] sm:$0xf]
        %v283 = vld [vmem:[#allocation5 + $0x10] sm:$0xf]
        %v284 = vld [vmem:[#allocation5 + $0x14] sm:$0xf]
        %v285 = vld [vmem:[#allocation5 + $0x18] sm:$0xf]
        %v286 = vld [vmem:[#allocation5 + $0x1c] sm:$0xf]
        %v287 = vld [vmem:[#allocation5 + $0x20] sm:$0xf]
        %v288 = vld [vmem:[#allocation5 + $0x24] sm:$0xf]
        %v289 = vld [vmem:[#allocation5 + $0x28] sm:$0xf]
        %v290 = vld [vmem:[#allocation5 + $0x2c] sm:$0xf]
        %v291 = vld [vmem:[#allocation5 + $0x30] sm:$0xf]
        %v292 = vld [vmem:[#allocation5 + $0x34] sm:$0xf]
        %v293 = vld [vmem:[#allocation5 + $0x38] sm:$0xf]
        %v294 = vld [vmem:[#allocation5 + $0x3c] sm:$0xf]
        %v295 = vlaneseq
        %v296 = vshrl.u32 %v295, 7
        %v297 = vsub.s32 0, %v296
        %v298 = vrot.slane %v261, %v297
        %v315 = vunpack.c.l.b16 %v279
        %v316 = vunpack.c.l.b16 %v280
        %v317 = vunpack.c.l.b16 %v281
        %v318 = vunpack.c.l.b16 %v282
        %v319 = vunpack.c.l.b16 %v283
        %v320 = vunpack.c.l.b16 %v284
        %v321 = vunpack.c.l.b16 %v285
        %v322 = vunpack.c.l.b16 %v286
        %v323 = vunpack.c.l.b16 %v287
        %v324 = vunpack.c.l.b16 %v288
        %v325 = vunpack.c.l.b16 %v289
        %v326 = vunpack.c.l.b16 %v290
        %v327 = vunpack.c.l.b16 %v291
        %v328 = vunpack.c.l.b16 %v292
        %v329 = vunpack.c.l.b16 %v293
        %v330 = vunpack.c.l.b16 %v294
        %v331 = vpack.c.b16 %v316, %v315
        %v332 = vpack.c.b16 %v318, %v317
        %v333 = vpack.c.b16 %v320, %v319
        %v334 = vpack.c.b16 %v322, %v321
        %v335 = vpack.c.b16 %v324, %v323
        %v336 = vpack.c.b16 %v326, %v325
        %v337 = vpack.c.b16 %v328, %v327
        %v338 = vpack.c.b16 %v330, %v329
        %347 = vmatprep.subr.bf16.mxu0 0
        %348 = vmatpush1.bf16.msra.mxu0 %v338
        %349 = vmatprep.subr.bf16.mxu0 0
        %350 = vmatpush1.bf16.msra.mxu0 %v337
        %351 = vmatprep.subr.bf16.mxu0 0
        %352 = vmatpush1.bf16.msra.mxu0 %v336
        %353 = vmatprep.subr.bf16.mxu0 0
        %354 = vmatpush1.bf16.msra.mxu0 %v335
        %355 = vmatprep.subr.bf16.mxu0 0
        %356 = vmatpush1.bf16.msra.mxu0 %v334
        %357 = vmatprep.subr.bf16.mxu0 0
        %358 = vmatpush1.bf16.msra.mxu0 %v333
        %359 = vmatprep.subr.bf16.mxu0 0
        %360 = vmatpush1.bf16.msra.mxu0 %v332
        %361 = vmatprep.subr.bf16.mxu0 0
        %362 = vmatpush1.bf16.msra.mxu0 %v331
        %363 = vmatprep.subr.bf16.mxu0 0
        %364 = vmatpush2.bf16.msra.mxu0 0
        %365 = vmatprep.subr.bf16.mxu0 0
        %366 = vmatpush2.bf16.msra.mxu0 0
        %367 = vmatprep.subr.bf16.mxu0 0
        %368 = vmatpush2.bf16.msra.mxu0 0
        %369 = vmatprep.subr.bf16.mxu0 0
        %370 = vmatpush2.bf16.msra.mxu0 0
        %371 = vmatprep.subr.bf16.mxu0 0
        %372 = vmatpush2.bf16.msra.mxu0 0
        %373 = vmatprep.subr.bf16.mxu0 0
        %374 = vmatpush2.bf16.msra.mxu0 0
        %375 = vmatprep.subr.bf16.mxu0 0
        %376 = vmatpush2.bf16.msra.mxu0 0
        %377 = vmatprep.subr.bf16.mxu0 0
        %378 = vmatpush2.bf16.msra.mxu0 0
        %379 = vmatprep.mubr.bf16.mxu0 0
        %380 = vmatmul.mubr.bf16.gmra.mxu0 %v275
        %v381 = vpop.f32.mrf.mxu0
        %v382 = vadd.f32 %v298, %v381
        %v383 = vpop.f32.mrf.mxu0
        %v384 = vpop.f32.mrf.mxu0
        %v385 = vadd.f32 %v298, %v384
        %v386 = vpop.f32.mrf.mxu0
        %387 = vmatprep.mubr.bf16.mxu0 0
        %388 = vmatmul.mubr.bf16.gmra.mxu0 %v276
        %v389 = vpop.f32.mrf.mxu0
        %v390 = vadd.f32 %v298, %v389
        %v391 = vpop.f32.mrf.mxu0
        %v392 = vpop.f32.mrf.mxu0
        %v393 = vadd.f32 %v298, %v392
        %v394 = vpop.f32.mrf.mxu0
        %395 = vmatprep.mubr.bf16.mxu0 0
        %396 = vmatmul.mubr.bf16.gmra.mxu0 %v277
        %v397 = vpop.f32.mrf.mxu0
        %v398 = vadd.f32 %v298, %v397
        %v399 = vpop.f32.mrf.mxu0
        %v400 = vpop.f32.mrf.mxu0
        %v401 = vadd.f32 %v298, %v400
        %v402 = vpop.f32.mrf.mxu0
        %403 = vmatprep.mubr.bf16.mxu0 0
        %404 = vmatmul.mubr.bf16.gmra.mxu0 %v278
        %v405 = vpop.f32.mrf.mxu0
        %v406 = vadd.f32 %v298, %v405
        %v407 = vpop.f32.mrf.mxu0
        %v408 = vpop.f32.mrf.mxu0
        %v409 = vadd.f32 %v298, %v408
        %v410 = vpop.f32.mrf.mxu0
        %411 = vdwg.mxu0
        %v412 = vmax.f32 %v382, 0.0
        %v413 = vmax.f32 %v385, 0.0
        %v414 = vmax.f32 %v390, 0.0
        %v415 = vmax.f32 %v393, 0.0
        %v416 = vmax.f32 %v398, 0.0
        %v417 = vmax.f32 %v401, 0.0
        %v418 = vmax.f32 %v406, 0.0
        %v419 = vmax.f32 %v409, 0.0
        %v420 = vpack.c.bf16 %v413, %v412
        %v421 = vpack.c.bf16 %v415, %v414
        %v422 = vpack.c.bf16 %v417, %v416
        %v423 = vpack.c.bf16 %v419, %v418
        %v424 = vld [vmem:[#allocation7] sm:$0xf]
        %v425 = vld [vmem:[#allocation7 + $0x4] sm:$0xf]
        %v426 = vld [vmem:[#allocation7 + $0x8] sm:$0xf]
        %v427 = vld [vmem:[#allocation7 + $0xc] sm:$0xf]
        %v428 = vld [vmem:[#allocation7 + $0x10] sm:$0xf]
        %v429 = vld [vmem:[#allocation7 + $0x14] sm:$0xf]
        %v430 = vld [vmem:[#allocation7 + $0x18] sm:$0xf]
        %v431 = vld [vmem:[#allocation7 + $0x1c] sm:$0xf]
        %v432 = vld [vmem:[#allocation7 + $0x20] sm:$0xf]
        %v433 = vld [vmem:[#allocation7 + $0x24] sm:$0xf]
        %v434 = vld [vmem:[#allocation7 + $0x28] sm:$0xf]
        %v435 = vld [vmem:[#allocation7 + $0x2c] sm:$0xf]
        %v436 = vld [vmem:[#allocation7 + $0x30] sm:$0xf]
        %v437 = vld [vmem:[#allocation7 + $0x34] sm:$0xf]
        %v438 = vld [vmem:[#allocation7 + $0x38] sm:$0xf]
        %v439 = vld [vmem:[#allocation7 + $0x3c] sm:$0xf]
        %v440 = vlaneseq
        %v441 = vshrl.u32 %v440, 7
        %v442 = vsub.s32 0, %v441
        %v443 = vrot.slane %v262, %v442
        %v460 = vunpack.c.l.b16 %v424
        %v461 = vunpack.c.l.b16 %v425
        %v462 = vunpack.c.l.b16 %v426
        %v463 = vunpack.c.l.b16 %v427
        %v464 = vunpack.c.l.b16 %v428
        %v465 = vunpack.c.l.b16 %v429
        %v466 = vunpack.c.l.b16 %v430
        %v467 = vunpack.c.l.b16 %v431
        %v468 = vunpack.c.l.b16 %v432
        %v469 = vunpack.c.l.b16 %v433
        %v470 = vunpack.c.l.b16 %v434
        %v471 = vunpack.c.l.b16 %v435
        %v472 = vunpack.c.l.b16 %v436
        %v473 = vunpack.c.l.b16 %v437
        %v474 = vunpack.c.l.b16 %v438
        %v475 = vunpack.c.l.b16 %v439
        %v476 = vpack.c.b16 %v461, %v460
        %v477 = vpack.c.b16 %v463, %v462
        %v478 = vpack.c.b16 %v465, %v464
        %v479 = vpack.c.b16 %v467, %v466
        %v480 = vpack.c.b16 %v469, %v468
        %v481 = vpack.c.b16 %v471, %v470
        %v482 = vpack.c.b16 %v473, %v472
        %v483 = vpack.c.b16 %v475, %v474
        %492 = vmatprep.subr.bf16.mxu0 0
        %493 = vmatpush1.bf16.msra.mxu0 %v483
        %494 = vmatprep.subr.bf16.mxu0 0
        %495 = vmatpush1.bf16.msra.mxu0 %v482
        %496 = vmatprep.subr.bf16.mxu0 0
        %497 = vmatpush1.bf16.msra.mxu0 %v481
        %498 = vmatprep.subr.bf16.mxu0 0
        %499 = vmatpush1.bf16.msra.mxu0 %v480
        %500 = vmatprep.subr.bf16.mxu0 0
        %501 = vmatpush1.bf16.msra.mxu0 %v479
        %502 = vmatprep.subr.bf16.mxu0 0
        %503 = vmatpush1.bf16.msra.mxu0 %v478
        %504 = vmatprep.subr.bf16.mxu0 0
        %505 = vmatpush1.bf16.msra.mxu0 %v477
        %506 = vmatprep.subr.bf16.mxu0 0
        %507 = vmatpush1.bf16.msra.mxu0 %v476
        %508 = vmatprep.subr.bf16.mxu0 0
        %509 = vmatpush2.bf16.msra.mxu0 0
        %510 = vmatprep.subr.bf16.mxu0 0
        %511 = vmatpush2.bf16.msra.mxu0 0
        %512 = vmatprep.subr.bf16.mxu0 0
        %513 = vmatpush2.bf16.msra.mxu0 0
        %514 = vmatprep.subr.bf16.mxu0 0
        %515 = vmatpush2.bf16.msra.mxu0 0
        %516 = vmatprep.subr.bf16.mxu0 0
        %517 = vmatpush2.bf16.msra.mxu0 0
        %518 = vmatprep.subr.bf16.mxu0 0
        %519 = vmatpush2.bf16.msra.mxu0 0
        %520 = vmatprep.subr.bf16.mxu0 0
        %521 = vmatpush2.bf16.msra.mxu0 0
        %522 = vmatprep.subr.bf16.mxu0 0
        %523 = vmatpush2.bf16.msra.mxu0 0
        %524 = vmatprep.mubr.bf16.mxu0 0
        %525 = vmatmul.mubr.bf16.gmra.mxu0 %v420
        %v526 = vpop.f32.mrf.mxu0
        %v527 = vadd.f32 %v443, %v526
        %v528 = vpop.f32.mrf.mxu0
        %v529 = vpop.f32.mrf.mxu0
        %v530 = vadd.f32 %v443, %v529
        %v531 = vpop.f32.mrf.mxu0
        %532 = vmatprep.mubr.bf16.mxu0 0
        %533 = vmatmul.mubr.bf16.gmra.mxu0 %v421
        %v534 = vpop.f32.mrf.mxu0
        %v535 = vadd.f32 %v443, %v534
        %v536 = vpop.f32.mrf.mxu0
        %v537 = vpop.f32.mrf.mxu0
        %v538 = vadd.f32 %v443, %v537
        %v539 = vpop.f32.mrf.mxu0
        %540 = vmatprep.mubr.bf16.mxu0 0
        %541 = vmatmul.mubr.bf16.gmra.mxu0 %v422
        %v542 = vpop.f32.mrf.mxu0
        %v543 = vadd.f32 %v443, %v542
        %v544 = vpop.f32.mrf.mxu0
        %v545 = vpop.f32.mrf.mxu0
        %v546 = vadd.f32 %v443, %v545
        %v547 = vpop.f32.mrf.mxu0
        %548 = vmatprep.mubr.bf16.mxu0 0
        %549 = vmatmul.mubr.bf16.gmra.mxu0 %v423
        %v550 = vpop.f32.mrf.mxu0
        %v551 = vadd.f32 %v443, %v550
        %v552 = vpop.f32.mrf.mxu0
        %v553 = vpop.f32.mrf.mxu0
        %v554 = vadd.f32 %v443, %v553
        %v555 = vpop.f32.mrf.mxu0
        %556 = vdwg.mxu0
        %v557 = vmax.f32 %v527, 0.0
        %v558 = vmax.f32 %v530, 0.0
        %v559 = vmax.f32 %v535, 0.0
        %v560 = vmax.f32 %v538, 0.0
        %v561 = vmax.f32 %v543, 0.0
        %v562 = vmax.f32 %v546, 0.0
        %v563 = vmax.f32 %v551, 0.0
        %v564 = vmax.f32 %v554, 0.0
        %v565 = vpack.c.bf16 %v558, %v557
        %v566 = vpack.c.bf16 %v560, %v559
        %v567 = vpack.c.bf16 %v562, %v561
        %v568 = vpack.c.bf16 %v564, %v563
        %s569 = scalar_lea.vmem [#allocation7], 64
        %v570 = vld [vmem:[%s569] sm:$0xf]
        %v571 = vld [vmem:[%s569 + $0x4] sm:$0xf]
        %v572 = vld [vmem:[%s569 + $0x8] sm:$0xf]
        %v573 = vld [vmem:[%s569 + $0xc] sm:$0xf]
        %v574 = vld [vmem:[%s569 + $0x10] sm:$0xf]
        %v575 = vld [vmem:[%s569 + $0x14] sm:$0xf]
        %v576 = vld [vmem:[%s569 + $0x18] sm:$0xf]
        %v577 = vld [vmem:[%s569 + $0x1c] sm:$0xf]
        %v578 = vld [vmem:[%s569 + $0x20] sm:$0xf]
        %v579 = vld [vmem:[%s569 + $0x24] sm:$0xf]
        %v580 = vld [vmem:[%s569 + $0x28] sm:$0xf]
        %v581 = vld [vmem:[%s569 + $0x2c] sm:$0xf]
        %v582 = vld [vmem:[%s569 + $0x30] sm:$0xf]
        %v583 = vld [vmem:[%s569 + $0x34] sm:$0xf]
        %v584 = vld [vmem:[%s569 + $0x38] sm:$0xf]
        %v585 = vld [vmem:[%s569 + $0x3c] sm:$0xf]
        %v586 = vlaneseq
        %v587 = vshrl.u32 %v586, 7
        %v588 = vsub.s32 0, %v587
        %v589 = vrot.slane %v263, %v588
        %v606 = vunpack.c.l.b16 %v570
        %v607 = vunpack.c.l.b16 %v571
        %v608 = vunpack.c.l.b16 %v572
        %v609 = vunpack.c.l.b16 %v573
        %v610 = vunpack.c.l.b16 %v574
        %v611 = vunpack.c.l.b16 %v575
        %v612 = vunpack.c.l.b16 %v576
        %v613 = vunpack.c.l.b16 %v577
        %v614 = vunpack.c.l.b16 %v578
        %v615 = vunpack.c.l.b16 %v579
        %v616 = vunpack.c.l.b16 %v580
        %v617 = vunpack.c.l.b16 %v581
        %v618 = vunpack.c.l.b16 %v582
        %v619 = vunpack.c.l.b16 %v583
        %v620 = vunpack.c.l.b16 %v584
        %v621 = vunpack.c.l.b16 %v585
        %v622 = vpack.c.b16 %v607, %v606
        %v623 = vpack.c.b16 %v609, %v608
        %v624 = vpack.c.b16 %v611, %v610
        %v625 = vpack.c.b16 %v613, %v612
        %v626 = vpack.c.b16 %v615, %v614
        %v627 = vpack.c.b16 %v617, %v616
        %v628 = vpack.c.b16 %v619, %v618
        %v629 = vpack.c.b16 %v621, %v620
        %638 = vmatprep.subr.bf16.mxu0 0
        %639 = vmatpush1.bf16.msra.mxu0 %v629
        %640 = vmatprep.subr.bf16.mxu0 0
        %641 = vmatpush1.bf16.msra.mxu0 %v628
        %642 = vmatprep.subr.bf16.mxu0 0
        %643 = vmatpush1.bf16.msra.mxu0 %v627
        %644 = vmatprep.subr.bf16.mxu0 0
        %645 = vmatpush1.bf16.msra.mxu0 %v626
        %646 = vmatprep.subr.bf16.mxu0 0
        %647 = vmatpush1.bf16.msra.mxu0 %v625
        %648 = vmatprep.subr.bf16.mxu0 0
        %649 = vmatpush1.bf16.msra.mxu0 %v624
        %650 = vmatprep.subr.bf16.mxu0 0
        %651 = vmatpush1.bf16.msra.mxu0 %v623
        %652 = vmatprep.subr.bf16.mxu0 0
        %653 = vmatpush1.bf16.msra.mxu0 %v622
        %654 = vmatprep.subr.bf16.mxu0 0
        %655 = vmatpush2.bf16.msra.mxu0 0
        %656 = vmatprep.subr.bf16.mxu0 0
        %657 = vmatpush2.bf16.msra.mxu0 0
        %658 = vmatprep.subr.bf16.mxu0 0
        %659 = vmatpush2.bf16.msra.mxu0 0
        %660 = vmatprep.subr.bf16.mxu0 0
        %661 = vmatpush2.bf16.msra.mxu0 0
        %662 = vmatprep.subr.bf16.mxu0 0
        %663 = vmatpush2.bf16.msra.mxu0 0
        %664 = vmatprep.subr.bf16.mxu0 0
        %665 = vmatpush2.bf16.msra.mxu0 0
        %666 = vmatprep.subr.bf16.mxu0 0
        %667 = vmatpush2.bf16.msra.mxu0 0
        %668 = vmatprep.subr.bf16.mxu0 0
        %669 = vmatpush2.bf16.msra.mxu0 0
        %670 = vmatprep.mubr.bf16.mxu0 0
        %671 = vmatmul.mubr.bf16.gmra.mxu0 %v565
        %v672 = vpop.f32.mrf.mxu0
        %v673 = vadd.f32 %v589, %v672
        %v674 = vpop.f32.mrf.mxu0
        %v675 = vpop.f32.mrf.mxu0
        %v676 = vadd.f32 %v589, %v675
        %v677 = vpop.f32.mrf.mxu0
        %678 = vmatprep.mubr.bf16.mxu0 0
        %679 = vmatmul.mubr.bf16.gmra.mxu0 %v566
        %v680 = vpop.f32.mrf.mxu0
        %v681 = vadd.f32 %v589, %v680
        %v682 = vpop.f32.mrf.mxu0
        %v683 = vpop.f32.mrf.mxu0
        %v684 = vadd.f32 %v589, %v683
        %v685 = vpop.f32.mrf.mxu0
        %686 = vmatprep.mubr.bf16.mxu0 0
        %687 = vmatmul.mubr.bf16.gmra.mxu0 %v567
        %v688 = vpop.f32.mrf.mxu0
        %v689 = vadd.f32 %v589, %v688
        %v690 = vpop.f32.mrf.mxu0
        %v691 = vpop.f32.mrf.mxu0
        %v692 = vadd.f32 %v589, %v691
        %v693 = vpop.f32.mrf.mxu0
        %694 = vmatprep.mubr.bf16.mxu0 0
        %695 = vmatmul.mubr.bf16.gmra.mxu0 %v568
        %v696 = vpop.f32.mrf.mxu0
        %v697 = vadd.f32 %v589, %v696
        %v698 = vpop.f32.mrf.mxu0
        %v699 = vpop.f32.mrf.mxu0
        %v700 = vadd.f32 %v589, %v699
        %v701 = vpop.f32.mrf.mxu0
        %702 = vdwg.mxu0
        %v703 = vmax.f32 %v673, 0.0
        %v704 = vmax.f32 %v676, 0.0
        %v705 = vmax.f32 %v681, 0.0
        %v706 = vmax.f32 %v684, 0.0
        %v707 = vmax.f32 %v689, 0.0
        %v708 = vmax.f32 %v692, 0.0
        %v709 = vmax.f32 %v697, 0.0
        %v710 = vmax.f32 %v700, 0.0
        %v711 = vpack.c.bf16 %v704, %v703
        %v712 = vpack.c.bf16 %v706, %v705
        %v713 = vpack.c.bf16 %v708, %v707
        %v714 = vpack.c.bf16 %v710, %v709
        %s715 = scalar_lea.vmem [#allocation7], 128
        %v716 = vld [vmem:[%s715] sm:$0xf]
        %v717 = vld [vmem:[%s715 + $0x4] sm:$0xf]
        %v718 = vld [vmem:[%s715 + $0x8] sm:$0xf]
        %v719 = vld [vmem:[%s715 + $0xc] sm:$0xf]
        %v720 = vld [vmem:[%s715 + $0x10] sm:$0xf]
        %v721 = vld [vmem:[%s715 + $0x14] sm:$0xf]
        %v722 = vld [vmem:[%s715 + $0x18] sm:$0xf]
        %v723 = vld [vmem:[%s715 + $0x1c] sm:$0xf]
        %v724 = vld [vmem:[%s715 + $0x20] sm:$0xf]
        %v725 = vld [vmem:[%s715 + $0x24] sm:$0xf]
        %v726 = vld [vmem:[%s715 + $0x28] sm:$0xf]
        %v727 = vld [vmem:[%s715 + $0x2c] sm:$0xf]
        %v728 = vld [vmem:[%s715 + $0x30] sm:$0xf]
        %v729 = vld [vmem:[%s715 + $0x34] sm:$0xf]
        %v730 = vld [vmem:[%s715 + $0x38] sm:$0xf]
        %v731 = vld [vmem:[%s715 + $0x3c] sm:$0xf]
        %v732 = vlaneseq
        %v733 = vshrl.u32 %v732, 7
        %v734 = vsub.s32 0, %v733
        %v735 = vrot.slane %v264, %v734
        %v752 = vunpack.c.l.b16 %v716
        %v753 = vunpack.c.l.b16 %v717
        %v754 = vunpack.c.l.b16 %v718
        %v755 = vunpack.c.l.b16 %v719
        %v756 = vunpack.c.l.b16 %v720
        %v757 = vunpack.c.l.b16 %v721
        %v758 = vunpack.c.l.b16 %v722
        %v759 = vunpack.c.l.b16 %v723
        %v760 = vunpack.c.l.b16 %v724
        %v761 = vunpack.c.l.b16 %v725
        %v762 = vunpack.c.l.b16 %v726
        %v763 = vunpack.c.l.b16 %v727
        %v764 = vunpack.c.l.b16 %v728
        %v765 = vunpack.c.l.b16 %v729
        %v766 = vunpack.c.l.b16 %v730
        %v767 = vunpack.c.l.b16 %v731
        %v768 = vpack.c.b16 %v753, %v752
        %v769 = vpack.c.b16 %v755, %v754
        %v770 = vpack.c.b16 %v757, %v756
        %v771 = vpack.c.b16 %v759, %v758
        %v772 = vpack.c.b16 %v761, %v760
        %v773 = vpack.c.b16 %v763, %v762
        %v774 = vpack.c.b16 %v765, %v764
        %v775 = vpack.c.b16 %v767, %v766
        %784 = vmatprep.subr.bf16.mxu0 0
        %785 = vmatpush1.bf16.msra.mxu0 %v775
        %786 = vmatprep.subr.bf16.mxu0 0
        %787 = vmatpush1.bf16.msra.mxu0 %v774
        %788 = vmatprep.subr.bf16.mxu0 0
        %789 = vmatpush1.bf16.msra.mxu0 %v773
        %790 = vmatprep.subr.bf16.mxu0 0
        %791 = vmatpush1.bf16.msra.mxu0 %v772
        %792 = vmatprep.subr.bf16.mxu0 0
        %793 = vmatpush1.bf16.msra.mxu0 %v771
        %794 = vmatprep.subr.bf16.mxu0 0
        %795 = vmatpush1.bf16.msra.mxu0 %v770
        %796 = vmatprep.subr.bf16.mxu0 0
        %797 = vmatpush1.bf16.msra.mxu0 %v769
        %798 = vmatprep.subr.bf16.mxu0 0
        %799 = vmatpush1.bf16.msra.mxu0 %v768
        %800 = vmatprep.subr.bf16.mxu0 0
        %801 = vmatpush2.bf16.msra.mxu0 0
        %802 = vmatprep.subr.bf16.mxu0 0
        %803 = vmatpush2.bf16.msra.mxu0 0
        %804 = vmatprep.subr.bf16.mxu0 0
        %805 = vmatpush2.bf16.msra.mxu0 0
        %806 = vmatprep.subr.bf16.mxu0 0
        %807 = vmatpush2.bf16.msra.mxu0 0
        %808 = vmatprep.subr.bf16.mxu0 0
        %809 = vmatpush2.bf16.msra.mxu0 0
        %810 = vmatprep.subr.bf16.mxu0 0
        %811 = vmatpush2.bf16.msra.mxu0 0
        %812 = vmatprep.subr.bf16.mxu0 0
        %813 = vmatpush2.bf16.msra.mxu0 0
        %814 = vmatprep.subr.bf16.mxu0 0
        %815 = vmatpush2.bf16.msra.mxu0 0
        %816 = vmatprep.mubr.bf16.mxu0 0
        %817 = vmatmul.mubr.bf16.gmra.mxu0 %v711
        %v818 = vpop.f32.mrf.mxu0
        %v819 = vadd.f32 %v735, %v818
        %v820 = vpop.f32.mrf.mxu0
        %v821 = vpop.f32.mrf.mxu0
        %v822 = vadd.f32 %v735, %v821
        %v823 = vpop.f32.mrf.mxu0
        %824 = vmatprep.mubr.bf16.mxu0 0
        %825 = vmatmul.mubr.bf16.gmra.mxu0 %v712
        %v826 = vpop.f32.mrf.mxu0
        %v827 = vadd.f32 %v735, %v826
        %v828 = vpop.f32.mrf.mxu0
        %v829 = vpop.f32.mrf.mxu0
        %v830 = vadd.f32 %v735, %v829
        %v831 = vpop.f32.mrf.mxu0
        %832 = vmatprep.mubr.bf16.mxu0 0
        %833 = vmatmul.mubr.bf16.gmra.mxu0 %v713
        %v834 = vpop.f32.mrf.mxu0
        %v835 = vadd.f32 %v735, %v834
        %v836 = vpop.f32.mrf.mxu0
        %v837 = vpop.f32.mrf.mxu0
        %v838 = vadd.f32 %v735, %v837
        %v839 = vpop.f32.mrf.mxu0
        %840 = vmatprep.mubr.bf16.mxu0 0
        %841 = vmatmul.mubr.bf16.gmra.mxu0 %v714
        %v842 = vpop.f32.mrf.mxu0
        %v843 = vadd.f32 %v735, %v842
        %v844 = vpop.f32.mrf.mxu0
        %v845 = vpop.f32.mrf.mxu0
        %v846 = vadd.f32 %v735, %v845
        %v847 = vpop.f32.mrf.mxu0
        %848 = vdwg.mxu0
        %849 = vadd.xlane.f32.xlu0 %v819
        %v850 = vpop.xlane.xlu0 %849
        %851 = vadd.xlane.f32.xlu0 %v822
        %v852 = vpop.xlane.xlu0 %851
        %853 = vadd.xlane.f32.xlu0 %v827
        %v854 = vpop.xlane.xlu0 %853
        %855 = vadd.xlane.f32.xlu0 %v830
        %v856 = vpop.xlane.xlu0 %855
        %857 = vadd.xlane.f32.xlu0 %v835
        %v858 = vpop.xlane.xlu0 %857
        %859 = vadd.xlane.f32.xlu0 %v838
        %v860 = vpop.xlane.xlu0 %859
        %861 = vadd.xlane.f32.xlu0 %v843
        %v862 = vpop.xlane.xlu0 %861
        %863 = vadd.xlane.f32.xlu0 %v846
        %v864 = vpop.xlane.xlu0 %863
        %v865 = vrcp.pop 128.0
        %v866 = vmul.f32 %v850, %v865
        %v867 = vmul.f32 %v852, %v865
        %v868 = vmul.f32 %v854, %v865
        %v869 = vmul.f32 %v856, %v865
        %v870 = vmul.f32 %v858, %v865
        %v871 = vmul.f32 %v860, %v865
        %v872 = vmul.f32 %v862, %v865
        %v873 = vmul.f32 %v864, %v865
        %v874 = vsub.f32 %v819, %v866
        %v875 = vsub.f32 %v822, %v867
        %v876 = vsub.f32 %v827, %v868
        %v877 = vsub.f32 %v830, %v869
        %v878 = vsub.f32 %v835, %v870
        %v879 = vsub.f32 %v838, %v871
        %v880 = vsub.f32 %v843, %v872
        %v881 = vsub.f32 %v846, %v873
        %v882 = vmul.f32 %v874, %v874
        %v883 = vmul.f32 %v875, %v875
        %v884 = vmul.f32 %v876, %v876
        %v885 = vmul.f32 %v877, %v877
        %v886 = vmul.f32 %v878, %v878
        %v887 = vmul.f32 %v879, %v879
        %v888 = vmul.f32 %v880, %v880
        %v889 = vmul.f32 %v881, %v881
        %890 = vadd.xlane.f32.xlu0 %v882
        %v891 = vpop.xlane.xlu0 %890
        %892 = vadd.xlane.f32.xlu0 %v883
        %v893 = vpop.xlane.xlu0 %892
        %894 = vadd.xlane.f32.xlu0 %v884
        %v895 = vpop.xlane.xlu0 %894
        %896 = vadd.xlane.f32.xlu0 %v885
        %v897 = vpop.xlane.xlu0 %896
        %898 = vadd.xlane.f32.xlu0 %v886
        %v899 = vpop.xlane.xlu0 %898
        %900 = vadd.xlane.f32.xlu0 %v887
        %v901 = vpop.xlane.xlu0 %900
        %902 = vadd.xlane.f32.xlu0 %v888
        %v903 = vpop.xlane.xlu0 %902
        %904 = vadd.xlane.f32.xlu0 %v889
        %v905 = vpop.xlane.xlu0 %904
        %v906 = vmul.f32 %v891, %v865
        %v907 = vmul.f32 %v893, %v865
        %v908 = vmul.f32 %v895, %v865
        %v909 = vmul.f32 %v897, %v865
        %v910 = vmul.f32 %v899, %v865
        %v911 = vmul.f32 %v901, %v865
        %v912 = vmul.f32 %v903, %v865
        %v913 = vmul.f32 %v905, %v865
        %v914 = vadd.f32 %v906, 1e-05
        %v915 = vadd.f32 %v907, 1e-05
        %v916 = vadd.f32 %v908, 1e-05
        %v917 = vadd.f32 %v909, 1e-05
        %v918 = vadd.f32 %v910, 1e-05
        %v919 = vadd.f32 %v911, 1e-05
        %v920 = vadd.f32 %v912, 1e-05
        %v921 = vadd.f32 %v913, 1e-05
        %v922 = vrsqrt.pop %v914
        %v923 = vrsqrt.pop %v915
        %v924 = vrsqrt.pop %v916
        %v925 = vrsqrt.pop %v917
        %v926 = vrsqrt.pop %v918
        %v927 = vrsqrt.pop %v919
        %v928 = vrsqrt.pop %v920
        %v929 = vrsqrt.pop %v921
        %v930 = vmul.f32 %v874, %v922
        %v931 = vmul.f32 %v875, %v923
        %v932 = vmul.f32 %v876, %v924
        %v933 = vmul.f32 %v877, %v925
        %v934 = vmul.f32 %v878, %v926
        %v935 = vmul.f32 %v879, %v927
        %v936 = vmul.f32 %v880, %v928
        %v937 = vmul.f32 %v881, %v929
        %v938 = vlaneseq
        %v939 = vshrl.u32 %v938, 7
        %v940 = vsub.s32 0, %v939
        %v941 = vrot.slane %v265, %v940
        %v942 = vmul.f32 %v930, %v941
        %v943 = vmul.f32 %v931, %v941
        %v944 = vmul.f32 %v932, %v941
        %v945 = vmul.f32 %v933, %v941
        %v946 = vmul.f32 %v934, %v941
        %v947 = vmul.f32 %v935, %v941
        %v948 = vmul.f32 %v936, %v941
        %v949 = vmul.f32 %v937, %v941
        %v950 = vlaneseq
        %v951 = vshrl.u32 %v950, 7
        %v952 = vsub.s32 0, %v951
        %v953 = vrot.slane %v266, %v952
        %v954 = vadd.f32 %v942, %v953
        %v955 = vadd.f32 %v943, %v953
        %v956 = vadd.f32 %v944, %v953
        %v957 = vadd.f32 %v945, %v953
        %v958 = vadd.f32 %v946, %v953
        %v959 = vadd.f32 %v947, %v953
        %v960 = vadd.f32 %v948, %v953
        %v961 = vadd.f32 %v949, %v953
        %962 = vst [vmem:[%s257] sm:$0xff] %v954
        %963 = vst [vmem:[%s257 + $0x8] sm:$0xff] %v955
        %964 = vst [vmem:[%s257 + $0x10] sm:$0xff] %v956
        %965 = vst [vmem:[%s257 + $0x18] sm:$0xff] %v957
        %966 = vst [vmem:[%s257 + $0x20] sm:$0xff] %v958
        %967 = vst [vmem:[%s257 + $0x28] sm:$0xff] %v959
        %968 = vst [vmem:[%s257 + $0x30] sm:$0xff] %v960
        %969 = vst [vmem:[%s257 + $0x38] sm:$0xff] %v961
        %s970 = sand.u32 %s120, 1
        %s971 = scalar_lea.sflag [#allocation4], %s970
        %s972 = sand.u32 %s120, 1
        %s973 = smul.addr %s972, 64
        %s974 = scalar_lea.vmem [#allocation10], %s973
        // Predicated region
        $region53: #{encoder_forward.2} parent=35 // pred_check
          %p975 = pneg %p130
        $region54: #{encoder_forward.2} parent=35 // pred_check_branch
          %977 = sbr.rel (%p975) target = $region56
        $region55: #{encoder_forward.2} parent=35 // pred_region
          %s978 = smul.u32 8, %s23
          %s980 = ssub.s32 1024, 1024
          %981 = vsyncadd %s971, %s980
          %s982 = smul.addr %s978, 128
          %s983 = scalar_lea.hbm %s4, %s982
          %s984 = sshll.u32 %s974, 4
          %s985 = int_to_ptr.vmem [resolvable:$true] %s984
          %990 = dma.vmem_to_hbm [thread:$0]  %s985, 1024, %s983, %s971, 128, 128, 8
        $region56: #{encoder_forward.2} parent=35 // pred_fallthru
          _
      $region36: #{encoder_forward.2} parent=5 // pred_fallthru
        _
      %p991 = scmp.le.s32.totalorder 2, %s18
      // Predicated region
      $region57: #{encoder_forward.2} parent=5 // pred_check
        %p992 = pneg %p991
      $region58: #{encoder_forward.2} parent=5 // pred_check_branch
        %994 = sbr.rel (%p992) target = $region60
      $region59: #{encoder_forward.2} parent=5 // pred_region
        %s995 = ssub.s32 %s18, 2
        // Predicated region
        $region61: #{encoder_forward.2} parent=59 // pred_check
          %p996 = pneg %p136
        $region62: #{encoder_forward.2} parent=59 // pred_check_branch
          %998 = sbr.rel (%p996) target = $region64
        $region63: #{encoder_forward.2} parent=59 // pred_region
          %s999 = sand.u32 %s121, 1
          %s1000 = scalar_lea.sflag [#allocation4], %s999
          %s1001 = sand.u32 %s121, 1
          %s1002 = smul.addr %s1001, 64
          %s1003 = scalar_lea.vmem [#allocation10], %s1002
          %1004 = dma.done %s1000, 1024
        $region64: #{encoder_forward.2} parent=59 // pred_fallthru
          _
      $region60: #{encoder_forward.2} parent=5 // pred_fallthru
        _
    $region6: #{encoder_forward.2} parent=1 // loop_footer
      %s22 = sadd.s32 1, %s18
    $region7: #{encoder_forward.2} parent=1 // loop_footer_branch
      %17 = sbr.rel target = $region3
    $region8: #{encoder_forward.2} parent=1 // loop_exit
      _
    %1005 = vsyncpa [#allocation3], 1
    %s1006 = scalar_lea.sflag [#allocation3], 1
    %1007 = vsyncpa %s1006, 1
    %1008 = vsyncpa [#allocation6], 1
    %1009 = vsyncpa [#allocation9], 1
    %1010 = vsyncpa [#allocation4], 1
    %s1011 = scalar_lea.sflag [#allocation4], 1
    %1012 = vsyncpa %s1011, 1

// kernel: encoder_forward.3
$region0: #{encoder_forward.3}
  #allocation0 [shape = 'u32[]', space=smem, size = 0x4, offset = 0x4, fixed_abs, tag = 'smem constant byte address 0x4 - core index']
  #allocation1 [shape = 'u32[144,128]{1,0:T(1,128)}', space=vmem, size = 0x12000, scoped, tag = 'internal scratch']
  %s0 = inlined_call_operand.vmem [shape: f32[256,128], index: 0, kind: input, shape index: {}]
  %s1 = inlined_call_operand.vmem [shape: bf16[128,128], index: 1, kind: input, shape index: {}]
  %s2 = inlined_call_operand.vmem [shape: bf16[3,128,128], index: 2, kind: input, shape index: {}]
  %s3 = inlined_call_operand.vmem [shape: f32[6,128], index: 3, kind: input, shape index: {}]
  %s4 = inlined_call_operand.hbm [shape: f32[256,128], index: 4, kind: output, shape index: {}]
  %s5 = sld [smem:[#allocation0]]
  $region49: #{encoder_forward.3} parent=0
    _
  %s7 = ssub.s32 1, %s5
  %s8 = scalar_select 0, %s7, %s5
  $region1: #{encoder_forward.3} parent=0
    #allocation2 [shape = 'u8[131072]{0}', space=vmem, size = 0x20000, scoped, tag = 'output window, operand 0']
    #allocation3 [shape = 's32[2]{0}', space=sflag, size = 0x8, scoped, tag = 'scoped memory for encoder_forward.3']
    %9 = vsyncpa [#allocation3], 0
    %s10 = scalar_lea.sflag [#allocation3], 1
    %11 = vsyncpa %s10, 0
    loop: start=0, step=1, limit=4
    $region2: #{encoder_forward.3} parent=1 // loop_pre_header
      _
    $region3: #{encoder_forward.3} parent=1 // loop_header
      %s13 = sphi 0, %s17
      %p14 = scmp.ge.s32.totalorder %s13, 4
      %s23 = sphi 0, %s25
      %s26 = sphi 0, %s23
      %s27 = sphi 0, %s26
      %s43 = sphi 0, %s27
      %s47 = sphi 0, %s47
      %s49 = sphi 0, %s47
      %s50 = sphi 0, %s49
      %s64 = sphi 0, %s50
      %s68 = sphi 0, %s68
      %s70 = sphi 0, %s68
      %s71 = sphi 0, %s70
      %s85 = sphi 0, %s71
      %s89 = sphi 0, %s89
      %s91 = sphi 0, %s89
      %s92 = sphi 0, %s91
      %s106 = sphi 0, %s92
      %s112 = sphi 0, %s114
      %s115 = sphi 0, %s112
      %s116 = sphi 0, %s115
      %s132 = sphi 0, %s116
    $region4: #{encoder_forward.3} parent=1 // loop_header_branch
      %16 = sbr.rel (%p14) target = $region8
    $region5: #{encoder_forward.3} parent=1 // loop_body
      %s18 = ssub.s32 %s13, 1
      %s19 = ssub.s32 %s13, 2
      %s20 = sadd.s32 %s13, 1
      %s21 = ssub.s32 %s13, %s20
      %p22 = scmp.eq.s32.totalorder %s21, 0
      %s24 = sadd.s32 %s23, 1
      %s25 = scalar_select %p22, %s23, %s24
      %p28 = pneg %p22
      %p29 = scmp.eq.s32.totalorder %s13, 1
      %p30 = por %p28, %p29
      %p31 = scmp.ne.s32.totalorder %s23, %s26
      %p32 = scmp.eq.s32.totalorder %s13, 0
      %p33 = por %p31, %p32
      %p34 = scmp.ne.s32.totalorder %s23, %s26
      %p35 = scmp.eq.s32.totalorder %s18, 1
      %p36 = por %p34, %p35
      %p37 = scmp.ne.s32.totalorder %s26, %s27
      %p38 = scmp.eq.s32.totalorder %s18, 0
      %p39 = por %p37, %p38
      %p40 = scmp.ne.s32.totalorder %s26, %s27
      %p41 = scmp.eq.s32.totalorder %s19, 1
      %p42 = por %p40, %p41
      %p44 = scmp.ne.s32.totalorder %s27, %s43
      %p45 = scmp.eq.s32.totalorder %s19, 0
      %p46 = por %p44, %p45
      %s48 = sadd.s32 %s47, 1
      %p51 = scmp.eq.s32.totalorder %s13, 1
      %p52 = scmp.ne.s32.totalorder %s47, %s49
      %p53 = scmp.eq.s32.totalorder %s13, 0
      %p54 = por %p52, %p53
      %p55 = scmp.ne.s32.totalorder %s47, %s49
      %p56 = scmp.eq.s32.totalorder %s18, 1
      %p57 = por %p55, %p56
      %p58 = scmp.ne.s32.totalorder %s49, %s50
      %p59 = scmp.eq.s32.totalorder %s18, 0
      %p60 = por %p58, %p59
      %p61 = scmp.ne.s32.totalorder %s49, %s50
      %p62 = scmp.eq.s32.totalorder %s19, 1
      %p63 = por %p61, %p62
      %p65 = scmp.ne.s32.totalorder %s50, %s64
      %p66 = scmp.eq.s32.totalorder %s19, 0
      %p67 = por %p65, %p66
      %s69 = sadd.s32 %s68, 1
      %p72 = scmp.eq.s32.totalorder %s13, 1
      %p73 = scmp.ne.s32.totalorder %s68, %s70
      %p74 = scmp.eq.s32.totalorder %s13, 0
      %p75 = por %p73, %p74
      %p76 = scmp.ne.s32.totalorder %s68, %s70
      %p77 = scmp.eq.s32.totalorder %s18, 1
      %p78 = por %p76, %p77
      %p79 = scmp.ne.s32.totalorder %s70, %s71
      %p80 = scmp.eq.s32.totalorder %s18, 0
      %p81 = por %p79, %p80
      %p82 = scmp.ne.s32.totalorder %s70, %s71
      %p83 = scmp.eq.s32.totalorder %s19, 1
      %p84 = por %p82, %p83
      %p86 = scmp.ne.s32.totalorder %s71, %s85
      %p87 = scmp.eq.s32.totalorder %s19, 0
      %p88 = por %p86, %p87
      %s90 = sadd.s32 %s89, 1
      %p93 = scmp.eq.s32.totalorder %s13, 1
      %p94 = scmp.ne.s32.totalorder %s89, %s91
      %p95 = scmp.eq.s32.totalorder %s13, 0
      %p96 = por %p94, %p95
      %p97 = scmp.ne.s32.totalorder %s89, %s91
      %p98 = scmp.eq.s32.totalorder %s18, 1
      %p99 = por %p97, %p98
      %p100 = scmp.ne.s32.totalorder %s91, %s92
      %p101 = scmp.eq.s32.totalorder %s18, 0
      %p102 = por %p100, %p101
      %p103 = scmp.ne.s32.totalorder %s91, %s92
      %p104 = scmp.eq.s32.totalorder %s19, 1
      %p105 = por %p103, %p104
      %p107 = scmp.ne.s32.totalorder %s92, %s106
      %p108 = scmp.eq.s32.totalorder %s19, 0
      %p109 = por %p107, %p108
      %s110 = ssub.s32 %s13, %s20
      %p111 = scmp.eq.s32.totalorder %s110, 0
      %s113 = sadd.s32 %s112, 1
      %s114 = scalar_select %p111, %s112, %s113
      %p117 = pneg %p111
      %p118 = scmp.eq.s32.totalorder %s13, 1
      %p119 = por %p117, %p118
      %p120 = scmp.ne.s32.totalorder %s112, %s115
      %p121 = scmp.eq.s32.totalorder %s13, 0
      %p122 = por %p120, %p121
      %p123 = scmp.ne.s32.totalorder %s112, %s115
      %p124 = scmp.eq.s32.totalorder %s18, 1
      %p125 = por %p123, %p124
      %p126 = scmp.ne.s32.totalorder %s115, %s116
      %p127 = scmp.eq.s32.totalorder %s18, 0
      %p128 = por %p126, %p127
      %p129 = scmp.ne.s32.totalorder %s115, %s116
      %p130 = scmp.eq.s32.totalorder %s19, 1
      %p131 = por %p129, %p130
      %p133 = scmp.ne.s32.totalorder %s116, %s132
      %p134 = scmp.eq.s32.totalorder %s19, 0
      %p135 = por %p133, %p134
      %p136 = scmp.le.s32.totalorder 1, %s13
      %p137 = scmp.lt.s32.totalorder %s13, 3
      %p138 = pnand %p136, %p137
      %p139 = pneg %p138
      // Predicated region
      $region9: #{encoder_forward.3} parent=5 // pred_check
        _
      $region10: #{encoder_forward.3} parent=5 // pred_check_branch
        %141 = sbr.rel (%p138) target = $region12
      $region11: #{encoder_forward.3} parent=5 // pred_region
        %s142 = ssub.s32 %s13, 1
        // Predicated region
        $region13: #{encoder_forward.3} parent=11 // pred_check
          %p143 = pneg %p60
        $region14: #{encoder_forward.3} parent=11 // pred_check_branch
          %145 = sbr.rel (%p143) target = $region16
        $region15: #{encoder_forward.3} parent=11 // pred_region
          _
        $region16: #{encoder_forward.3} parent=11 // pred_fallthru
          _
        // Predicated region
        $region17: #{encoder_forward.3} parent=11 // pred_check
          %p146 = pneg %p81
        $region18: #{encoder_forward.3} parent=11 // pred_check_branch
          %148 = sbr.rel (%p146) target = $region20
        $region19: #{encoder_forward.3} parent=11 // pred_region
          _
        $region20: #{encoder_forward.3} parent=11 // pred_fallthru
          _
        // Predicated region
        $region21: #{encoder_forward.3} parent=11 // pred_check
          %p149 = pneg %p102
        $region22: #{encoder_forward.3} parent=11 // pred_check_branch
          %151 = sbr.rel (%p149) target = $region24
        $region23: #{encoder_forward.3} parent=11 // pred_region
          _
        $region24: #{encoder_forward.3} parent=11 // pred_fallthru
          _
      $region12: #{encoder_forward.3} parent=5 // pred_fallthru
        _
      %p152 = scmp.lt.s32.totalorder %s13, 2
      // Predicated region
      $region25: #{encoder_forward.3} parent=5 // pred_check
        %p153 = pneg %p152
      $region26: #{encoder_forward.3} parent=5 // pred_check_branch
        %155 = sbr.rel (%p153) target = $region28
      $region27: #{encoder_forward.3} parent=5 // pred_region
        // Predicated region
        $region29: #{encoder_forward.3} parent=27 // pred_check
          %p156 = pneg %p33
        $region30: #{encoder_forward.3} parent=27 // pred_check_branch
          %158 = sbr.rel (%p156) target = $region32
        $region31: #{encoder_forward.3} parent=27 // pred_region
          %s159 = smul.u32 16, %s13
          %p160 = scmp.lt.s32.totalorder %s159, 31
          %s161 = scalar_select %p160, %s159, 31
          %s162 = smul.addr %s161, 8
          %s163 = scalar_lea.vmem %s0, %s162
          %s164 = smul.u32 16, %s13
        $region32: #{encoder_forward.3} parent=27 // pred_fallthru
          _
      $region28: #{encoder_forward.3} parent=5 // pred_fallthru
        _
      %p165 = scmp.le.s32.totalorder 1, %s13
      %p166 = scmp.lt.s32.totalorder %s13, 3
      %p167 = pnand %p165, %p166
      %p168 = pneg %p167
      // Predicated region
      $region33: #{encoder_forward.3} parent=5 // pred_check
        _
      $region34: #{encoder_forward.3} parent=5 // pred_check_branch
        %170 = sbr.rel (%p167) target = $region36
      $region35: #{encoder_forward.3} parent=5 // pred_region
        %s171 = ssub.s32 %s13, 1
        %s172 = smul.u32 16, %s18
        %p173 = scmp.lt.s32.totalorder %s172, 31
        %s174 = scalar_select %p173, %s172, 31
        %s175 = smul.addr %s174, 8
        %s176 = scalar_lea.vmem %s0, %s175
        %p177 = pneg %p39
        %p178 = pneg %p36
        %p179 = pneg %p60
        %p180 = pneg %p57
        %p181 = pneg %p81
        %p182 = pneg %p78
        %p183 = pneg %p102
        %p184 = pneg %p99
        %p185 = pneg %p128
        %p186 = pneg %p125
        %s187 = sand.u32 %s115, 1
        %s188 = scalar_lea.sflag [#allocation3], %s187
        %s189 = sand.u32 %s115, 1
        %s190 = smul.addr %s189, 128
        %s191 = scalar_lea.vmem [#allocation2], %s190
        %s192 = smul.u32 16, %s18
        %p193 = scmp.lt.s32.totalorder %s192, 31
        %s194 = scalar_select %p193, %s192, 31
        %s195 = smul.addr %s194, 8
        %s196 = scalar_lea.vmem %s0, %s195
        %s197 = smul.u32 16, %s18
        %s198 = smul.u32 16, %s18
        %v200 = vld [vmem:[%s3] sm:$0x1]
        %v201 = vld [vmem:[%s3 + $0x1] sm:$0x1]
        %v202 = vld [vmem:[%s3 + $0x2] sm:$0x1]
        %v203 = vld [vmem:[%s3 + $0x3] sm:$0x1]
        %v204 = vld [vmem:[%s3 + $0x4] sm:$0x1]
        %v205 = vld [vmem:[%s3 + $0x5] sm:$0x1]
        %v206 = vld [vmem:[%s196] sm:$0xff]
        %v207 = vld [vmem:[%s196 + $0x8] sm:$0xff]
        %v208 = vld [vmem:[%s196 + $0x10] sm:$0xff]
        %v209 = vld [vmem:[%s196 + $0x18] sm:$0xff]
        %v210 = vld [vmem:[%s196 + $0x20] sm:$0xff]
        %v211 = vld [vmem:[%s196 + $0x28] sm:$0xff]
        %v212 = vld [vmem:[%s196 + $0x30] sm:$0xff]
        %v213 = vld [vmem:[%s196 + $0x38] sm:$0xff]
        %v214 = vld [vmem:[%s196 + $0x40] sm:$0xff]
        %v215 = vld [vmem:[%s196 + $0x48] sm:$0xff]
        %v216 = vld [vmem:[%s196 + $0x50] sm:$0xff]
        %v217 = vld [vmem:[%s196 + $0x58] sm:$0xff]
        %v218 = vld [vmem:[%s196 + $0x60] sm:$0xff]
        %v219 = vld [vmem:[%s196 + $0x68] sm:$0xff]
        %v220 = vld [vmem:[%s196 + $0x70] sm:$0xff]
        %v221 = vld [vmem:[%s196 + $0x78] sm:$0xff]
        %v222 = vpack.c.bf16 %v207, %v206
        %v223 = vpack.c.bf16 %v209, %v208
        %v224 = vpack.c.bf16 %v211, %v210
        %v225 = vpack.c.bf16 %v213, %v212
        %v226 = vpack.c.bf16 %v215, %v214
        %v227 = vpack.c.bf16 %v217, %v216
        %v228 = vpack.c.bf16 %v219, %v218
        %v229 = vpack.c.bf16 %v221, %v220
        %v230 = vld [vmem:[%s1] sm:$0xf]
        %v231 = vld [vmem:[%s1 + $0x4] sm:$0xf]
        %v232 = vld [vmem:[%s1 + $0x8] sm:$0xf]
        %v233 = vld [vmem:[%s1 + $0xc] sm:$0xf]
        %v234 = vld [vmem:[%s1 + $0x10] sm:$0xf]
        %v235 = vld [vmem:[%s1 + $0x14] sm:$0xf]
        %v236 = vld [vmem:[%s1 + $0x18] sm:$0xf]
        %v237 = vld [vmem:[%s1 + $0x1c] sm:$0xf]
        %v238 = vld [vmem:[%s1 + $0x20] sm:$0xf]
        %v239 = vld [vmem:[%s1 + $0x24] sm:$0xf]
        %v240 = vld [vmem:[%s1 + $0x28] sm:$0xf]
        %v241 = vld [vmem:[%s1 + $0x2c] sm:$0xf]
        %v242 = vld [vmem:[%s1 + $0x30] sm:$0xf]
        %v243 = vld [vmem:[%s1 + $0x34] sm:$0xf]
        %v244 = vld [vmem:[%s1 + $0x38] sm:$0xf]
        %v245 = vld [vmem:[%s1 + $0x3c] sm:$0xf]
        %v246 = vlaneseq
        %v247 = vshrl.u32 %v246, 7
        %v248 = vsub.s32 0, %v247
        %v249 = vrot.slane %v200, %v248
        %v266 = vunpack.c.l.b16 %v230
        %v267 = vunpack.c.l.b16 %v231
        %v268 = vunpack.c.l.b16 %v232
        %v269 = vunpack.c.l.b16 %v233
        %v270 = vunpack.c.l.b16 %v234
        %v271 = vunpack.c.l.b16 %v235
        %v272 = vunpack.c.l.b16 %v236
        %v273 = vunpack.c.l.b16 %v237
        %v274 = vunpack.c.l.b16 %v238
        %v275 = vunpack.c.l.b16 %v239
        %v276 = vunpack.c.l.b16 %v240
        %v277 = vunpack.c.l.b16 %v241
        %v278 = vunpack.c.l.b16 %v242
        %v279 = vunpack.c.l.b16 %v243
        %v280 = vunpack.c.l.b16 %v244
        %v281 = vunpack.c.l.b16 %v245
        %v282 = vpack.c.b16 %v267, %v266
        %v283 = vpack.c.b16 %v269, %v268
        %v284 = vpack.c.b16 %v271, %v270
        %v285 = vpack.c.b16 %v273, %v272
        %v286 = vpack.c.b16 %v275, %v274
        %v287 = vpack.c.b16 %v277, %v276
        %v288 = vpack.c.b16 %v279, %v278
        %v289 = vpack.c.b16 %v281, %v280
        %298 = vmatprep.subr.bf16.mxu0 0
        %299 = vmatpush1.bf16.msra.mxu0 %v289
        %300 = vmatprep.subr.bf16.mxu0 0
        %301 = vmatpush1.bf16.msra.mxu0 %v288
        %302 = vmatprep.subr.bf16.mxu0 0
        %303 = vmatpush1.bf16.msra.mxu0 %v287
        %304 = vmatprep.subr.bf16.mxu0 0
        %305 = vmatpush1.bf16.msra.mxu0 %v286
        %306 = vmatprep.subr.bf16.mxu0 0
        %307 = vmatpush1.bf16.msra.mxu0 %v285
        %308 = vmatprep.subr.bf16.mxu0 0
        %309 = vmatpush1.bf16.msra.mxu0 %v284
        %310 = vmatprep.subr.bf16.mxu0 0
        %311 = vmatpush1.bf16.msra.mxu0 %v283
        %312 = vmatprep.subr.bf16.mxu0 0
        %313 = vmatpush1.bf16.msra.mxu0 %v282
        %314 = vmatprep.subr.bf16.mxu0 0
        %315 = vmatpush2.bf16.msra.mxu0 0
        %316 = vmatprep.subr.bf16.mxu0 0
        %317 = vmatpush2.bf16.msra.mxu0 0
        %318 = vmatprep.subr.bf16.mxu0 0
        %319 = vmatpush2.bf16.msra.mxu0 0
        %320 = vmatprep.subr.bf16.mxu0 0
        %321 = vmatpush2.bf16.msra.mxu0 0
        %322 = vmatprep.subr.bf16.mxu0 0
        %323 = vmatpush2.bf16.msra.mxu0 0
        %324 = vmatprep.subr.bf16.mxu0 0
        %325 = vmatpush2.bf16.msra.mxu0 0
        %326 = vmatprep.subr.bf16.mxu0 0
        %327 = vmatpush2.bf16.msra.mxu0 0
        %328 = vmatprep.subr.bf16.mxu0 0
        %329 = vmatpush2.bf16.msra.mxu0 0
        %330 = vmatprep.mubr.bf16.mxu0 0
        %331 = vmatmul.mubr.bf16.gmra.mxu0 %v222
        %v332 = vpop.f32.mrf.mxu0
        %v333 = vadd.f32 %v249, %v332
        %v334 = vpop.f32.mrf.mxu0
        %v335 = vpop.f32.mrf.mxu0
        %v336 = vadd.f32 %v249, %v335
        %v337 = vpop.f32.mrf.mxu0
        %338 = vmatprep.mubr.bf16.mxu0 0
        %339 = vmatmul.mubr.bf16.gmra.mxu0 %v223
        %v340 = vpop.f32.mrf.mxu0
        %v341 = vadd.f32 %v249, %v340
        %v342 = vpop.f32.mrf.mxu0
        %v343 = vpop.f32.mrf.mxu0
        %v344 = vadd.f32 %v249, %v343
        %v345 = vpop.f32.mrf.mxu0
        %346 = vmatprep.mubr.bf16.mxu0 0
        %347 = vmatmul.mubr.bf16.gmra.mxu0 %v224
        %v348 = vpop.f32.mrf.mxu0
        %v349 = vadd.f32 %v249, %v348
        %v350 = vpop.f32.mrf.mxu0
        %v351 = vpop.f32.mrf.mxu0
        %v352 = vadd.f32 %v249, %v351
        %v353 = vpop.f32.mrf.mxu0
        %354 = vmatprep.mubr.bf16.mxu0 0
        %355 = vmatmul.mubr.bf16.gmra.mxu0 %v225
        %v356 = vpop.f32.mrf.mxu0
        %v357 = vadd.f32 %v249, %v356
        %v358 = vpop.f32.mrf.mxu0
        %v359 = vpop.f32.mrf.mxu0
        %v360 = vadd.f32 %v249, %v359
        %v361 = vpop.f32.mrf.mxu0
        %362 = vmatprep.mubr.bf16.mxu0 0
        %363 = vmatmul.mubr.bf16.gmra.mxu0 %v226
        %v364 = vpop.f32.mrf.mxu0
        %v365 = vadd.f32 %v249, %v364
        %v366 = vpop.f32.mrf.mxu0
        %v367 = vpop.f32.mrf.mxu0
        %v368 = vadd.f32 %v249, %v367
        %v369 = vpop.f32.mrf.mxu0
        %370 = vmatprep.mubr.bf16.mxu0 0
        %371 = vmatmul.mubr.bf16.gmra.mxu0 %v227
        %v372 = vpop.f32.mrf.mxu0
        %v373 = vadd.f32 %v249, %v372
        %v374 = vpop.f32.mrf.mxu0
        %v375 = vpop.f32.mrf.mxu0
        %v376 = vadd.f32 %v249, %v375
        %v377 = vpop.f32.mrf.mxu0
        %378 = vmatprep.mubr.bf16.mxu0 0
        %379 = vmatmul.mubr.bf16.gmra.mxu0 %v228
        %v380 = vpop.f32.mrf.mxu0
        %v381 = vadd.f32 %v249, %v380
        %v382 = vpop.f32.mrf.mxu0
        %v383 = vpop.f32.mrf.mxu0
        %v384 = vadd.f32 %v249, %v383
        %v385 = vpop.f32.mrf.mxu0
        %386 = vmatprep.mubr.bf16.mxu0 0
        %387 = vmatmul.mubr.bf16.gmra.mxu0 %v229
        %v388 = vpop.f32.mrf.mxu0
        %v389 = vadd.f32 %v249, %v388
        %v390 = vpop.f32.mrf.mxu0
        %v391 = vpop.f32.mrf.mxu0
        %v392 = vadd.f32 %v249, %v391
        %v393 = vpop.f32.mrf.mxu0
        %394 = vdwg.mxu0
        %v395 = vmax.f32 %v333, 0.0
        %v396 = vmax.f32 %v336, 0.0
        %v397 = vmax.f32 %v341, 0.0
        %v398 = vmax.f32 %v344, 0.0
        %v399 = vmax.f32 %v349, 0.0
        %v400 = vmax.f32 %v352, 0.0
        %v401 = vmax.f32 %v357, 0.0
        %v402 = vmax.f32 %v360, 0.0
        %v403 = vmax.f32 %v365, 0.0
        %v404 = vmax.f32 %v368, 0.0
        %v405 = vmax.f32 %v373, 0.0
        %v406 = vmax.f32 %v376, 0.0
        %v407 = vmax.f32 %v381, 0.0
        %v408 = vmax.f32 %v384, 0.0
        %v409 = vmax.f32 %v389, 0.0
        %v410 = vmax.f32 %v392, 0.0
        %v411 = vpack.c.bf16 %v396, %v395
        %v412 = vpack.c.bf16 %v398, %v397
        %v413 = vpack.c.bf16 %v400, %v399
        %v414 = vpack.c.bf16 %v402, %v401
        %v415 = vpack.c.bf16 %v404, %v403
        %v416 = vpack.c.bf16 %v406, %v405
        %v417 = vpack.c.bf16 %v408, %v407
        %v418 = vpack.c.bf16 %v410, %v409
        %v419 = vld [vmem:[%s2] sm:$0xf]
        %v420 = vld [vmem:[%s2 + $0x4] sm:$0xf]
        %v421 = vld [vmem:[%s2 + $0x8] sm:$0xf]
        %v422 = vld [vmem:[%s2 + $0xc] sm:$0xf]
        %v423 = vld [vmem:[%s2 + $0x10] sm:$0xf]
        %v424 = vld [vmem:[%s2 + $0x14] sm:$0xf]
        %v425 = vld [vmem:[%s2 + $0x18] sm:$0xf]
        %v426 = vld [vmem:[%s2 + $0x1c] sm:$0xf]
        %v427 = vld [vmem:[%s2 + $0x20] sm:$0xf]
        %v428 = vld [vmem:[%s2 + $0x24] sm:$0xf]
        %v429 = vld [vmem:[%s2 + $0x28] sm:$0xf]
        %v430 = vld [vmem:[%s2 + $0x2c] sm:$0xf]
        %v431 = vld [vmem:[%s2 + $0x30] sm:$0xf]
        %v432 = vld [vmem:[%s2 + $0x34] sm:$0xf]
        %v433 = vld [vmem:[%s2 + $0x38] sm:$0xf]
        %v434 = vld [vmem:[%s2 + $0x3c] sm:$0xf]
        %v435 = vlaneseq
        %v436 = vshrl.u32 %v435, 7
        %v437 = vsub.s32 0, %v436
        %v438 = vrot.slane %v201, %v437
        %v455 = vunpack.c.l.b16 %v419
        %v456 = vunpack.c.l.b16 %v420
        %v457 = vunpack.c.l.b16 %v421
        %v458 = vunpack.c.l.b16 %v422
        %v459 = vunpack.c.l.b16 %v423
        %v460 = vunpack.c.l.b16 %v424
        %v461 = vunpack.c.l.b16 %v425
        %v462 = vunpack.c.l.b16 %v426
        %v463 = vunpack.c.l.b16 %v427
        %v464 = vunpack.c.l.b16 %v428
        %v465 = vunpack.c.l.b16 %v429
        %v466 = vunpack.c.l.b16 %v430
        %v467 = vunpack.c.l.b16 %v431
        %v468 = vunpack.c.l.b16 %v432
        %v469 = vunpack.c.l.b16 %v433
        %v470 = vunpack.c.l.b16 %v434
        %v471 = vpack.c.b16 %v456, %v455
        %v472 = vpack.c.b16 %v458, %v457
        %v473 = vpack.c.b16 %v460, %v459
        %v474 = vpack.c.b16 %v462, %v461
        %v475 = vpack.c.b16 %v464, %v463
        %v476 = vpack.c.b16 %v466, %v465
        %v477 = vpack.c.b16 %v468, %v467
        %v478 = vpack.c.b16 %v470, %v469
        %487 = vmatprep.subr.bf16.mxu0 0
        %488 = vmatpush1.bf16.msra.mxu0 %v478
        %489 = vmatprep.subr.bf16.mxu0 0
        %490 = vmatpush1.bf16.msra.mxu0 %v477
        %491 = vmatprep.subr.bf16.mxu0 0
        %492 = vmatpush1.bf16.msra.mxu0 %v476
        %493 = vmatprep.subr.bf16.mxu0 0
        %494 = vmatpush1.bf16.msra.mxu0 %v475
        %495 = vmatprep.subr.bf16.mxu0 0
        %496 = vmatpush1.bf16.msra.mxu0 %v474
        %497 = vmatprep.subr.bf16.mxu0 0
        %498 = vmatpush1.bf16.msra.mxu0 %v473
        %499 = vmatprep.subr.bf16.mxu0 0
        %500 = vmatpush1.bf16.msra.mxu0 %v472
        %501 = vmatprep.subr.bf16.mxu0 0
        %502 = vmatpush1.bf16.msra.mxu0 %v471
        %503 = vmatprep.subr.bf16.mxu0 0
        %504 = vmatpush2.bf16.msra.mxu0 0
        %505 = vmatprep.subr.bf16.mxu0 0
        %506 = vmatpush2.bf16.msra.mxu0 0
        %507 = vmatprep.subr.bf16.mxu0 0
        %508 = vmatpush2.bf16.msra.mxu0 0
        %509 = vmatprep.subr.bf16.mxu0 0
        %510 = vmatpush2.bf16.msra.mxu0 0
        %511 = vmatprep.subr.bf16.mxu0 0
        %512 = vmatpush2.bf16.msra.mxu0 0
        %513 = vmatprep.subr.bf16.mxu0 0
        %514 = vmatpush2.bf16.msra.mxu0 0
        %515 = vmatprep.subr.bf16.mxu0 0
        %516 = vmatpush2.bf16.msra.mxu0 0
        %517 = vmatprep.subr.bf16.mxu0 0
        %518 = vmatpush2.bf16.msra.mxu0 0
        %519 = vmatprep.mubr.bf16.mxu0 0
        %520 = vmatmul.mubr.bf16.gmra.mxu0 %v411
        %v521 = vpop.f32.mrf.mxu0
        %v522 = vadd.f32 %v438, %v521
        %v523 = vpop.f32.mrf.mxu0
        %v524 = vpop.f32.mrf.mxu0
        %v525 = vadd.f32 %v438, %v524
        %v526 = vpop.f32.mrf.mxu0
        %527 = vmatprep.mubr.bf16.mxu0 0
        %528 = vmatmul.mubr.bf16.gmra.mxu0 %v412
        %v529 = vpop.f32.mrf.mxu0
        %v530 = vadd.f32 %v438, %v529
        %v531 = vpop.f32.mrf.mxu0
        %v532 = vpop.f32.mrf.mxu0
        %v533 = vadd.f32 %v438, %v532
        %v534 = vpop.f32.mrf.mxu0
        %535 = vmatprep.mubr.bf16.mxu0 0
        %536 = vmatmul.mubr.bf16.gmra.mxu0 %v413
        %v537 = vpop.f32.mrf.mxu0
        %v538 = vadd.f32 %v438, %v537
        %v539 = vpop.f32.mrf.mxu0
        %v540 = vpop.f32.mrf.mxu0
        %v541 = vadd.f32 %v438, %v540
        %v542 = vpop.f32.mrf.mxu0
        %543 = vmatprep.mubr.bf16.mxu0 0
        %544 = vmatmul.mubr.bf16.gmra.mxu0 %v414
        %v545 = vpop.f32.mrf.mxu0
        %v546 = vadd.f32 %v438, %v545
        %v547 = vpop.f32.mrf.mxu0
        %v548 = vpop.f32.mrf.mxu0
        %v549 = vadd.f32 %v438, %v548
        %v550 = vpop.f32.mrf.mxu0
        %551 = vmatprep.mubr.bf16.mxu0 0
        %552 = vmatmul.mubr.bf16.gmra.mxu0 %v415
        %v553 = vpop.f32.mrf.mxu0
        %v554 = vadd.f32 %v438, %v553
        %v555 = vpop.f32.mrf.mxu0
        %v556 = vpop.f32.mrf.mxu0
        %v557 = vadd.f32 %v438, %v556
        %v558 = vpop.f32.mrf.mxu0
        %559 = vmatprep.mubr.bf16.mxu0 0
        %560 = vmatmul.mubr.bf16.gmra.mxu0 %v416
        %v561 = vpop.f32.mrf.mxu0
        %v562 = vadd.f32 %v438, %v561
        %v563 = vpop.f32.mrf.mxu0
        %v564 = vpop.f32.mrf.mxu0
        %v565 = vadd.f32 %v438, %v564
        %v566 = vpop.f32.mrf.mxu0
        %567 = vmatprep.mubr.bf16.mxu0 0
        %568 = vmatmul.mubr.bf16.gmra.mxu0 %v417
        %v569 = vpop.f32.mrf.mxu0
        %v570 = vadd.f32 %v438, %v569
        %v571 = vpop.f32.mrf.mxu0
        %v572 = vpop.f32.mrf.mxu0
        %v573 = vadd.f32 %v438, %v572
        %v574 = vpop.f32.mrf.mxu0
        %575 = vmatprep.mubr.bf16.mxu0 0
        %576 = vmatmul.mubr.bf16.gmra.mxu0 %v418
        %v577 = vpop.f32.mrf.mxu0
        %v578 = vadd.f32 %v438, %v577
        %v579 = vpop.f32.mrf.mxu0
        %v580 = vpop.f32.mrf.mxu0
        %v581 = vadd.f32 %v438, %v580
        %v582 = vpop.f32.mrf.mxu0
        %583 = vdwg.mxu0
        %v584 = vmax.f32 %v522, 0.0
        %v585 = vmax.f32 %v525, 0.0
        %v586 = vmax.f32 %v530, 0.0
        %v587 = vmax.f32 %v533, 0.0
        %v588 = vmax.f32 %v538, 0.0
        %v589 = vmax.f32 %v541, 0.0
        %v590 = vmax.f32 %v546, 0.0
        %v591 = vmax.f32 %v549, 0.0
        %v592 = vmax.f32 %v554, 0.0
        %v593 = vmax.f32 %v557, 0.0
        %v594 = vmax.f32 %v562, 0.0
        %v595 = vmax.f32 %v565, 0.0
        %v596 = vmax.f32 %v570, 0.0
        %v597 = vmax.f32 %v573, 0.0
        %v598 = vmax.f32 %v578, 0.0
        %v599 = vmax.f32 %v581, 0.0
        %v600 = vpack.c.bf16 %v585, %v584
        %v601 = vpack.c.bf16 %v587, %v586
        %v602 = vpack.c.bf16 %v589, %v588
        %v603 = vpack.c.bf16 %v591, %v590
        %v604 = vpack.c.bf16 %v593, %v592
        %v605 = vpack.c.bf16 %v595, %v594
        %v606 = vpack.c.bf16 %v597, %v596
        %v607 = vpack.c.bf16 %v599, %v598
        %s608 = scalar_lea.vmem %s2, 64
        %v609 = vld [vmem:[%s608] sm:$0xf]
        %v610 = vld [vmem:[%s608 + $0x4] sm:$0xf]
        %v611 = vld [vmem:[%s608 + $0x8] sm:$0xf]
        %v612 = vld [vmem:[%s608 + $0xc] sm:$0xf]
        %v613 = vld [vmem:[%s608 + $0x10] sm:$0xf]
        %v614 = vld [vmem:[%s608 + $0x14] sm:$0xf]
        %v615 = vld [vmem:[%s608 + $0x18] sm:$0xf]
        %v616 = vld [vmem:[%s608 + $0x1c] sm:$0xf]
        %v617 = vld [vmem:[%s608 + $0x20] sm:$0xf]
        %v618 = vld [vmem:[%s608 + $0x24] sm:$0xf]
        %v619 = vld [vmem:[%s608 + $0x28] sm:$0xf]
        %v620 = vld [vmem:[%s608 + $0x2c] sm:$0xf]
        %v621 = vld [vmem:[%s608 + $0x30] sm:$0xf]
        %v622 = vld [vmem:[%s608 + $0x34] sm:$0xf]
        %v623 = vld [vmem:[%s608 + $0x38] sm:$0xf]
        %v624 = vld [vmem:[%s608 + $0x3c] sm:$0xf]
        %v625 = vlaneseq
        %v626 = vshrl.u32 %v625, 7
        %v627 = vsub.s32 0, %v626
        %v628 = vrot.slane %v202, %v627
        %v645 = vunpack.c.l.b16 %v609
        %v646 = vunpack.c.l.b16 %v610
        %v647 = vunpack.c.l.b16 %v611
        %v648 = vunpack.c.l.b16 %v612
        %v649 = vunpack.c.l.b16 %v613
        %v650 = vunpack.c.l.b16 %v614
        %v651 = vunpack.c.l.b16 %v615
        %v652 = vunpack.c.l.b16 %v616
        %v653 = vunpack.c.l.b16 %v617
        %v654 = vunpack.c.l.b16 %v618
        %v655 = vunpack.c.l.b16 %v619
        %v656 = vunpack.c.l.b16 %v620
        %v657 = vunpack.c.l.b16 %v621
        %v658 = vunpack.c.l.b16 %v622
        %v659 = vunpack.c.l.b16 %v623
        %v660 = vunpack.c.l.b16 %v624
        %v661 = vpack.c.b16 %v646, %v645
        %v662 = vpack.c.b16 %v648, %v647
        %v663 = vpack.c.b16 %v650, %v649
        %v664 = vpack.c.b16 %v652, %v651
        %v665 = vpack.c.b16 %v654, %v653
        %v666 = vpack.c.b16 %v656, %v655
        %v667 = vpack.c.b16 %v658, %v657
        %v668 = vpack.c.b16 %v660, %v659
        %677 = vmatprep.subr.bf16.mxu0 0
        %678 = vmatpush1.bf16.msra.mxu0 %v668
        %679 = vmatprep.subr.bf16.mxu0 0
        %680 = vmatpush1.bf16.msra.mxu0 %v667
        %681 = vmatprep.subr.bf16.mxu0 0
        %682 = vmatpush1.bf16.msra.mxu0 %v666
        %683 = vmatprep.subr.bf16.mxu0 0
        %684 = vmatpush1.bf16.msra.mxu0 %v665
        %685 = vmatprep.subr.bf16.mxu0 0
        %686 = vmatpush1.bf16.msra.mxu0 %v664
        %687 = vmatprep.subr.bf16.mxu0 0
        %688 = vmatpush1.bf16.msra.mxu0 %v663
        %689 = vmatprep.subr.bf16.mxu0 0
        %690 = vmatpush1.bf16.msra.mxu0 %v662
        %691 = vmatprep.subr.bf16.mxu0 0
        %692 = vmatpush1.bf16.msra.mxu0 %v661
        %693 = vmatprep.subr.bf16.mxu0 0
        %694 = vmatpush2.bf16.msra.mxu0 0
        %695 = vmatprep.subr.bf16.mxu0 0
        %696 = vmatpush2.bf16.msra.mxu0 0
        %697 = vmatprep.subr.bf16.mxu0 0
        %698 = vmatpush2.bf16.msra.mxu0 0
        %699 = vmatprep.subr.bf16.mxu0 0
        %700 = vmatpush2.bf16.msra.mxu0 0
        %701 = vmatprep.subr.bf16.mxu0 0
        %702 = vmatpush2.bf16.msra.mxu0 0
        %703 = vmatprep.subr.bf16.mxu0 0
        %704 = vmatpush2.bf16.msra.mxu0 0
        %705 = vmatprep.subr.bf16.mxu0 0
        %706 = vmatpush2.bf16.msra.mxu0 0
        %707 = vmatprep.subr.bf16.mxu0 0
        %708 = vmatpush2.bf16.msra.mxu0 0
        %709 = vmatprep.mubr.bf16.mxu0 0
        %710 = vmatmul.mubr.bf16.gmra.mxu0 %v600
        %v711 = vpop.f32.mrf.mxu0
        %v712 = vadd.f32 %v628, %v711
        %v713 = vpop.f32.mrf.mxu0
        %v714 = vpop.f32.mrf.mxu0
        %v715 = vadd.f32 %v628, %v714
        %v716 = vpop.f32.mrf.mxu0
        %717 = vmatprep.mubr.bf16.mxu0 0
        %718 = vmatmul.mubr.bf16.gmra.mxu0 %v601
        %v719 = vpop.f32.mrf.mxu0
        %v720 = vadd.f32 %v628, %v719
        %v721 = vpop.f32.mrf.mxu0
        %v722 = vpop.f32.mrf.mxu0
        %v723 = vadd.f32 %v628, %v722
        %v724 = vpop.f32.mrf.mxu0
        %725 = vmatprep.mubr.bf16.mxu0 0
        %726 = vmatmul.mubr.bf16.gmra.mxu0 %v602
        %v727 = vpop.f32.mrf.mxu0
        %v728 = vadd.f32 %v628, %v727
        %v729 = vpop.f32.mrf.mxu0
        %v730 = vpop.f32.mrf.mxu0
        %v731 = vadd.f32 %v628, %v730
        %v732 = vpop.f32.mrf.mxu0
        %733 = vmatprep.mubr.bf16.mxu0 0
        %734 = vmatmul.mubr.bf16.gmra.mxu0 %v603
        %v735 = vpop.f32.mrf.mxu0
        %v736 = vadd.f32 %v628, %v735
        %v737 = vpop.f32.mrf.mxu0
        %v738 = vpop.f32.mrf.mxu0
        %v739 = vadd.f32 %v628, %v738
        %v740 = vpop.f32.mrf.mxu0
        %741 = vmatprep.mubr.bf16.mxu0 0
        %742 = vmatmul.mubr.bf16.gmra.mxu0 %v604
        %v743 = vpop.f32.mrf.mxu0
        %v744 = vadd.f32 %v628, %v743
        %v745 = vpop.f32.mrf.mxu0
        %v746 = vpop.f32.mrf.mxu0
        %v747 = vadd.f32 %v628, %v746
        %v748 = vpop.f32.mrf.mxu0
        %749 = vmatprep.mubr.bf16.mxu0 0
        %750 = vmatmul.mubr.bf16.gmra.mxu0 %v605
        %v751 = vpop.f32.mrf.mxu0
        %v752 = vadd.f32 %v628, %v751
        %v753 = vpop.f32.mrf.mxu0
        %v754 = vpop.f32.mrf.mxu0
        %v755 = vadd.f32 %v628, %v754
        %v756 = vpop.f32.mrf.mxu0
        %757 = vmatprep.mubr.bf16.mxu0 0
        %758 = vmatmul.mubr.bf16.gmra.mxu0 %v606
        %v759 = vpop.f32.mrf.mxu0
        %v760 = vadd.f32 %v628, %v759
        %v761 = vpop.f32.mrf.mxu0
        %v762 = vpop.f32.mrf.mxu0
        %v763 = vadd.f32 %v628, %v762
        %v764 = vpop.f32.mrf.mxu0
        %765 = vmatprep.mubr.bf16.mxu0 0
        %766 = vmatmul.mubr.bf16.gmra.mxu0 %v607
        %v767 = vpop.f32.mrf.mxu0
        %v768 = vadd.f32 %v628, %v767
        %v769 = vpop.f32.mrf.mxu0
        %v770 = vpop.f32.mrf.mxu0
        %v771 = vadd.f32 %v628, %v770
        %v772 = vpop.f32.mrf.mxu0
        %773 = vdwg.mxu0
        %v774 = vmax.f32 %v712, 0.0
        %v775 = vmax.f32 %v715, 0.0
        %v776 = vmax.f32 %v720, 0.0
        %v777 = vmax.f32 %v723, 0.0
        %v778 = vmax.f32 %v728, 0.0
        %v779 = vmax.f32 %v731, 0.0
        %v780 = vmax.f32 %v736, 0.0
        %v781 = vmax.f32 %v739, 0.0
        %v782 = vmax.f32 %v744, 0.0
        %v783 = vmax.f32 %v747, 0.0
        %v784 = vmax.f32 %v752, 0.0
        %v785 = vmax.f32 %v755, 0.0
        %v786 = vmax.f32 %v760, 0.0
        %v787 = vmax.f32 %v763, 0.0
        %v788 = vmax.f32 %v768, 0.0
        %v789 = vmax.f32 %v771, 0.0
        %v790 = vpack.c.bf16 %v775, %v774
        %v791 = vpack.c.bf16 %v777, %v776
        %v792 = vpack.c.bf16 %v779, %v778
        %v793 = vpack.c.bf16 %v781, %v780
        %v794 = vpack.c.bf16 %v783, %v782
        %v795 = vpack.c.bf16 %v785, %v784
        %v796 = vpack.c.bf16 %v787, %v786
        %v797 = vpack.c.bf16 %v789, %v788
        %s798 = scalar_lea.vmem %s2, 128
        %v799 = vld [vmem:[%s798] sm:$0xf]
        %v800 = vld [vmem:[%s798 + $0x4] sm:$0xf]
        %v801 = vld [vmem:[%s798 + $0x8] sm:$0xf]
        %v802 = vld [vmem:[%s798 + $0xc] sm:$0xf]
        %v803 = vld [vmem:[%s798 + $0x10] sm:$0xf]
        %v804 = vld [vmem:[%s798 + $0x14] sm:$0xf]
        %v805 = vld [vmem:[%s798 + $0x18] sm:$0xf]
        %v806 = vld [vmem:[%s798 + $0x1c] sm:$0xf]
        %v807 = vld [vmem:[%s798 + $0x20] sm:$0xf]
        %v808 = vld [vmem:[%s798 + $0x24] sm:$0xf]
        %v809 = vld [vmem:[%s798 + $0x28] sm:$0xf]
        %v810 = vld [vmem:[%s798 + $0x2c] sm:$0xf]
        %v811 = vld [vmem:[%s798 + $0x30] sm:$0xf]
        %v812 = vld [vmem:[%s798 + $0x34] sm:$0xf]
        %v813 = vld [vmem:[%s798 + $0x38] sm:$0xf]
        %v814 = vld [vmem:[%s798 + $0x3c] sm:$0xf]
        %v815 = vlaneseq
        %v816 = vshrl.u32 %v815, 7
        %v817 = vsub.s32 0, %v816
        %v818 = vrot.slane %v203, %v817
        %v835 = vunpack.c.l.b16 %v799
        %v836 = vunpack.c.l.b16 %v800
        %v837 = vunpack.c.l.b16 %v801
        %v838 = vunpack.c.l.b16 %v802
        %v839 = vunpack.c.l.b16 %v803
        %v840 = vunpack.c.l.b16 %v804
        %v841 = vunpack.c.l.b16 %v805
        %v842 = vunpack.c.l.b16 %v806
        %v843 = vunpack.c.l.b16 %v807
        %v844 = vunpack.c.l.b16 %v808
        %v845 = vunpack.c.l.b16 %v809
        %v846 = vunpack.c.l.b16 %v810
        %v847 = vunpack.c.l.b16 %v811
        %v848 = vunpack.c.l.b16 %v812
        %v849 = vunpack.c.l.b16 %v813
        %v850 = vunpack.c.l.b16 %v814
        %v851 = vpack.c.b16 %v836, %v835
        %v852 = vpack.c.b16 %v838, %v837
        %v853 = vpack.c.b16 %v840, %v839
        %v854 = vpack.c.b16 %v842, %v841
        %v855 = vpack.c.b16 %v844, %v843
        %v856 = vpack.c.b16 %v846, %v845
        %v857 = vpack.c.b16 %v848, %v847
        %v858 = vpack.c.b16 %v850, %v849
        %867 = vmatprep.subr.bf16.mxu0 0
        %868 = vmatpush1.bf16.msra.mxu0 %v858
        %869 = vmatprep.subr.bf16.mxu0 0
        %870 = vmatpush1.bf16.msra.mxu0 %v857
        %871 = vmatprep.subr.bf16.mxu0 0
        %872 = vmatpush1.bf16.msra.mxu0 %v856
        %873 = vmatprep.subr.bf16.mxu0 0
        %874 = vmatpush1.bf16.msra.mxu0 %v855
        %875 = vmatprep.subr.bf16.mxu0 0
        %876 = vmatpush1.bf16.msra.mxu0 %v854
        %877 = vmatprep.subr.bf16.mxu0 0
        %878 = vmatpush1.bf16.msra.mxu0 %v853
        %879 = vmatprep.subr.bf16.mxu0 0
        %880 = vmatpush1.bf16.msra.mxu0 %v852
        %881 = vmatprep.subr.bf16.mxu0 0
        %882 = vmatpush1.bf16.msra.mxu0 %v851
        %883 = vmatprep.subr.bf16.mxu0 0
        %884 = vmatpush2.bf16.msra.mxu0 0
        %885 = vmatprep.subr.bf16.mxu0 0
        %886 = vmatpush2.bf16.msra.mxu0 0
        %887 = vmatprep.subr.bf16.mxu0 0
        %888 = vmatpush2.bf16.msra.mxu0 0
        %889 = vmatprep.subr.bf16.mxu0 0
        %890 = vmatpush2.bf16.msra.mxu0 0
        %891 = vmatprep.subr.bf16.mxu0 0
        %892 = vmatpush2.bf16.msra.mxu0 0
        %893 = vmatprep.subr.bf16.mxu0 0
        %894 = vmatpush2.bf16.msra.mxu0 0
        %895 = vmatprep.subr.bf16.mxu0 0
        %896 = vmatpush2.bf16.msra.mxu0 0
        %897 = vmatprep.subr.bf16.mxu0 0
        %898 = vmatpush2.bf16.msra.mxu0 0
        %899 = vmatprep.mubr.bf16.mxu0 0
        %900 = vmatmul.mubr.bf16.gmra.mxu0 %v790
        %v901 = vpop.f32.mrf.mxu0
        %v902 = vadd.f32 %v818, %v901
        %v903 = vpop.f32.mrf.mxu0
        %v904 = vpop.f32.mrf.mxu0
        %v905 = vadd.f32 %v818, %v904
        %v906 = vpop.f32.mrf.mxu0
        %907 = vmatprep.mubr.bf16.mxu0 0
        %908 = vmatmul.mubr.bf16.gmra.mxu0 %v791
        %v909 = vpop.f32.mrf.mxu0
        %v910 = vadd.f32 %v818, %v909
        %v911 = vpop.f32.mrf.mxu0
        %v912 = vpop.f32.mrf.mxu0
        %v913 = vadd.f32 %v818, %v912
        %v914 = vpop.f32.mrf.mxu0
        %915 = vmatprep.mubr.bf16.mxu0 0
        %916 = vmatmul.mubr.bf16.gmra.mxu0 %v792
        %v917 = vpop.f32.mrf.mxu0
        %v918 = vadd.f32 %v818, %v917
        %v919 = vpop.f32.mrf.mxu0
        %v920 = vpop.f32.mrf.mxu0
        %v921 = vadd.f32 %v818, %v920
        %v922 = vpop.f32.mrf.mxu0
        %923 = vmatprep.mubr.bf16.mxu0 0
        %924 = vmatmul.mubr.bf16.gmra.mxu0 %v793
        %v925 = vpop.f32.mrf.mxu0
        %v926 = vadd.f32 %v818, %v925
        %v927 = vpop.f32.mrf.mxu0
        %v928 = vpop.f32.mrf.mxu0
        %v929 = vadd.f32 %v818, %v928
        %v930 = vpop.f32.mrf.mxu0
        %931 = vmatprep.mubr.bf16.mxu0 0
        %932 = vmatmul.mubr.bf16.gmra.mxu0 %v794
        %v933 = vpop.f32.mrf.mxu0
        %v934 = vadd.f32 %v818, %v933
        %v935 = vpop.f32.mrf.mxu0
        %v936 = vpop.f32.mrf.mxu0
        %v937 = vadd.f32 %v818, %v936
        %v938 = vpop.f32.mrf.mxu0
        %939 = vmatprep.mubr.bf16.mxu0 0
        %940 = vmatmul.mubr.bf16.gmra.mxu0 %v795
        %v941 = vpop.f32.mrf.mxu0
        %v942 = vadd.f32 %v818, %v941
        %v943 = vpop.f32.mrf.mxu0
        %v944 = vpop.f32.mrf.mxu0
        %v945 = vadd.f32 %v818, %v944
        %v946 = vpop.f32.mrf.mxu0
        %947 = vmatprep.mubr.bf16.mxu0 0
        %948 = vmatmul.mubr.bf16.gmra.mxu0 %v796
        %v949 = vpop.f32.mrf.mxu0
        %v950 = vadd.f32 %v818, %v949
        %v951 = vpop.f32.mrf.mxu0
        %v952 = vpop.f32.mrf.mxu0
        %v953 = vadd.f32 %v818, %v952
        %v954 = vpop.f32.mrf.mxu0
        %955 = vmatprep.mubr.bf16.mxu0 0
        %956 = vmatmul.mubr.bf16.gmra.mxu0 %v797
        %v957 = vpop.f32.mrf.mxu0
        %v958 = vadd.f32 %v818, %v957
        %v959 = vpop.f32.mrf.mxu0
        %v960 = vpop.f32.mrf.mxu0
        %v961 = vadd.f32 %v818, %v960
        %v962 = vpop.f32.mrf.mxu0
        %963 = vdwg.mxu0
        %964 = vadd.xlane.f32.xlu0 %v902
        %v965 = vpop.xlane.xlu0 %964
        %966 = vadd.xlane.f32.xlu0 %v905
        %v967 = vpop.xlane.xlu0 %966
        %968 = vadd.xlane.f32.xlu0 %v910
        %v969 = vpop.xlane.xlu0 %968
        %970 = vadd.xlane.f32.xlu0 %v913
        %v971 = vpop.xlane.xlu0 %970
        %972 = vadd.xlane.f32.xlu0 %v918
        %v973 = vpop.xlane.xlu0 %972
        %974 = vadd.xlane.f32.xlu0 %v921
        %v975 = vpop.xlane.xlu0 %974
        %976 = vadd.xlane.f32.xlu0 %v926
        %v977 = vpop.xlane.xlu0 %976
        %978 = vadd.xlane.f32.xlu0 %v929
        %v979 = vpop.xlane.xlu0 %978
        %980 = vadd.xlane.f32.xlu0 %v934
        %v981 = vpop.xlane.xlu0 %980
        %982 = vadd.xlane.f32.xlu0 %v937
        %v983 = vpop.xlane.xlu0 %982
        %984 = vadd.xlane.f32.xlu0 %v942
        %v985 = vpop.xlane.xlu0 %984
        %986 = vadd.xlane.f32.xlu0 %v945
        %v987 = vpop.xlane.xlu0 %986
        %988 = vadd.xlane.f32.xlu0 %v950
        %v989 = vpop.xlane.xlu0 %988
        %990 = vadd.xlane.f32.xlu0 %v953
        %v991 = vpop.xlane.xlu0 %990
        %992 = vadd.xlane.f32.xlu0 %v958
        %v993 = vpop.xlane.xlu0 %992
        %994 = vadd.xlane.f32.xlu0 %v961
        %v995 = vpop.xlane.xlu0 %994
        %v996 = vrcp.pop 128.0
        %v997 = vmul.f32 %v965, %v996
        %v998 = vmul.f32 %v967, %v996
        %v999 = vmul.f32 %v969, %v996
        %v1000 = vmul.f32 %v971, %v996
        %v1001 = vmul.f32 %v973, %v996
        %v1002 = vmul.f32 %v975, %v996
        %v1003 = vmul.f32 %v977, %v996
        %v1004 = vmul.f32 %v979, %v996
        %v1005 = vmul.f32 %v981, %v996
        %v1006 = vmul.f32 %v983, %v996
        %v1007 = vmul.f32 %v985, %v996
        %v1008 = vmul.f32 %v987, %v996
        %v1009 = vmul.f32 %v989, %v996
        %v1010 = vmul.f32 %v991, %v996
        %v1011 = vmul.f32 %v993, %v996
        %v1012 = vmul.f32 %v995, %v996
        %v1013 = vsub.f32 %v902, %v997
        %v1014 = vsub.f32 %v905, %v998
        %v1015 = vsub.f32 %v910, %v999
        %v1016 = vsub.f32 %v913, %v1000
        %v1017 = vsub.f32 %v918, %v1001
        %v1018 = vsub.f32 %v921, %v1002
        %v1019 = vsub.f32 %v926, %v1003
        %v1020 = vsub.f32 %v929, %v1004
        %v1021 = vsub.f32 %v934, %v1005
        %v1022 = vsub.f32 %v937, %v1006
        %v1023 = vsub.f32 %v942, %v1007
        %v1024 = vsub.f32 %v945, %v1008
        %v1025 = vsub.f32 %v950, %v1009
        %v1026 = vsub.f32 %v953, %v1010
        %v1027 = vsub.f32 %v958, %v1011
        %v1028 = vsub.f32 %v961, %v1012
        %v1029 = vmul.f32 %v1013, %v1013
        %v1030 = vmul.f32 %v1014, %v1014
        %v1031 = vmul.f32 %v1015, %v1015
        %v1032 = vmul.f32 %v1016, %v1016
        %v1033 = vmul.f32 %v1017, %v1017
        %v1034 = vmul.f32 %v1018, %v1018
        %v1035 = vmul.f32 %v1019, %v1019
        %v1036 = vmul.f32 %v1020, %v1020
        %v1037 = vmul.f32 %v1021, %v1021
        %v1038 = vmul.f32 %v1022, %v1022
        %v1039 = vmul.f32 %v1023, %v1023
        %v1040 = vmul.f32 %v1024, %v1024
        %v1041 = vmul.f32 %v1025, %v1025
        %v1042 = vmul.f32 %v1026, %v1026
        %v1043 = vmul.f32 %v1027, %v1027
        %v1044 = vmul.f32 %v1028, %v1028
        %1045 = vadd.xlane.f32.xlu0 %v1029
        %v1046 = vpop.xlane.xlu0 %1045
        %1047 = vadd.xlane.f32.xlu0 %v1030
        %v1048 = vpop.xlane.xlu0 %1047
        %1049 = vadd.xlane.f32.xlu0 %v1031
        %v1050 = vpop.xlane.xlu0 %1049
        %1051 = vadd.xlane.f32.xlu0 %v1032
        %v1052 = vpop.xlane.xlu0 %1051
        %1053 = vadd.xlane.f32.xlu0 %v1033
        %v1054 = vpop.xlane.xlu0 %1053
        %1055 = vadd.xlane.f32.xlu0 %v1034
        %v1056 = vpop.xlane.xlu0 %1055
        %1057 = vadd.xlane.f32.xlu0 %v1035
        %v1058 = vpop.xlane.xlu0 %1057
        %1059 = vadd.xlane.f32.xlu0 %v1036
        %v1060 = vpop.xlane.xlu0 %1059
        %1061 = vadd.xlane.f32.xlu0 %v1037
        %v1062 = vpop.xlane.xlu0 %1061
        %1063 = vadd.xlane.f32.xlu0 %v1038
        %v1064 = vpop.xlane.xlu0 %1063
        %1065 = vadd.xlane.f32.xlu0 %v1039
        %v1066 = vpop.xlane.xlu0 %1065
        %1067 = vadd.xlane.f32.xlu0 %v1040
        %v1068 = vpop.xlane.xlu0 %1067
        %1069 = vadd.xlane.f32.xlu0 %v1041
        %v1070 = vpop.xlane.xlu0 %1069
        %1071 = vadd.xlane.f32.xlu0 %v1042
        %v1072 = vpop.xlane.xlu0 %1071
        %1073 = vadd.xlane.f32.xlu0 %v1043
        %v1074 = vpop.xlane.xlu0 %1073
        %1075 = vadd.xlane.f32.xlu0 %v1044
        %v1076 = vpop.xlane.xlu0 %1075
        %v1077 = vmul.f32 %v1046, %v996
        %v1078 = vmul.f32 %v1048, %v996
        %v1079 = vmul.f32 %v1050, %v996
        %v1080 = vmul.f32 %v1052, %v996
        %v1081 = vmul.f32 %v1054, %v996
        %v1082 = vmul.f32 %v1056, %v996
        %v1083 = vmul.f32 %v1058, %v996
        %v1084 = vmul.f32 %v1060, %v996
        %v1085 = vmul.f32 %v1062, %v996
        %v1086 = vmul.f32 %v1064, %v996
        %v1087 = vmul.f32 %v1066, %v996
        %v1088 = vmul.f32 %v1068, %v996
        %v1089 = vmul.f32 %v1070, %v996
        %v1090 = vmul.f32 %v1072, %v996
        %v1091 = vmul.f32 %v1074, %v996
        %v1092 = vmul.f32 %v1076, %v996
        %v1093 = vadd.f32 %v1077, 1e-05
        %v1094 = vadd.f32 %v1078, 1e-05
        %v1095 = vadd.f32 %v1079, 1e-05
        %v1096 = vadd.f32 %v1080, 1e-05
        %v1097 = vadd.f32 %v1081, 1e-05
        %v1098 = vadd.f32 %v1082, 1e-05
        %v1099 = vadd.f32 %v1083, 1e-05
        %v1100 = vadd.f32 %v1084, 1e-05
        %v1101 = vadd.f32 %v1085, 1e-05
        %v1102 = vadd.f32 %v1086, 1e-05
        %v1103 = vadd.f32 %v1087, 1e-05
        %v1104 = vadd.f32 %v1088, 1e-05
        %v1105 = vadd.f32 %v1089, 1e-05
        %v1106 = vadd.f32 %v1090, 1e-05
        %v1107 = vadd.f32 %v1091, 1e-05
        %v1108 = vadd.f32 %v1092, 1e-05
        %v1109 = vrsqrt.pop %v1093
        %v1110 = vrsqrt.pop %v1094
        %v1111 = vrsqrt.pop %v1095
        %v1112 = vrsqrt.pop %v1096
        %v1113 = vrsqrt.pop %v1097
        %v1114 = vrsqrt.pop %v1098
        %v1115 = vrsqrt.pop %v1099
        %v1116 = vrsqrt.pop %v1100
        %v1117 = vrsqrt.pop %v1101
        %v1118 = vrsqrt.pop %v1102
        %v1119 = vrsqrt.pop %v1103
        %v1120 = vrsqrt.pop %v1104
        %v1121 = vrsqrt.pop %v1105
        %v1122 = vrsqrt.pop %v1106
        %v1123 = vrsqrt.pop %v1107
        %v1124 = vrsqrt.pop %v1108
        %v1125 = vmul.f32 %v1013, %v1109
        %v1126 = vmul.f32 %v1014, %v1110
        %v1127 = vmul.f32 %v1015, %v1111
        %v1128 = vmul.f32 %v1016, %v1112
        %v1129 = vmul.f32 %v1017, %v1113
        %v1130 = vmul.f32 %v1018, %v1114
        %v1131 = vmul.f32 %v1019, %v1115
        %v1132 = vmul.f32 %v1020, %v1116
        %v1133 = vmul.f32 %v1021, %v1117
        %v1134 = vmul.f32 %v1022, %v1118
        %v1135 = vmul.f32 %v1023, %v1119
        %v1136 = vmul.f32 %v1024, %v1120
        %v1137 = vmul.f32 %v1025, %v1121
        %v1138 = vmul.f32 %v1026, %v1122
        %v1139 = vmul.f32 %v1027, %v1123
        %v1140 = vmul.f32 %v1028, %v1124
        %v1141 = vlaneseq
        %v1142 = vshrl.u32 %v1141, 7
        %v1143 = vsub.s32 0, %v1142
        %v1144 = vrot.slane %v204, %v1143
        %v1145 = vmul.f32 %v1125, %v1144
        %v1146 = vmul.f32 %v1126, %v1144
        %v1147 = vmul.f32 %v1127, %v1144
        %v1148 = vmul.f32 %v1128, %v1144
        %v1149 = vmul.f32 %v1129, %v1144
        %v1150 = vmul.f32 %v1130, %v1144
        %v1151 = vmul.f32 %v1131, %v1144
        %v1152 = vmul.f32 %v1132, %v1144
        %v1153 = vmul.f32 %v1133, %v1144
        %v1154 = vmul.f32 %v1134, %v1144
        %v1155 = vmul.f32 %v1135, %v1144
        %v1156 = vmul.f32 %v1136, %v1144
        %v1157 = vmul.f32 %v1137, %v1144
        %v1158 = vmul.f32 %v1138, %v1144
        %v1159 = vmul.f32 %v1139, %v1144
        %v1160 = vmul.f32 %v1140, %v1144
        %v1161 = vlaneseq
        %v1162 = vshrl.u32 %v1161, 7
        %v1163 = vsub.s32 0, %v1162
        %v1164 = vrot.slane %v205, %v1163
        %v1165 = vadd.f32 %v1145, %v1164
        %v1166 = vadd.f32 %v1146, %v1164
        %v1167 = vadd.f32 %v1147, %v1164
        %v1168 = vadd.f32 %v1148, %v1164
        %v1169 = vadd.f32 %v1149, %v1164
        %v1170 = vadd.f32 %v1150, %v1164
        %v1171 = vadd.f32 %v1151, %v1164
        %v1172 = vadd.f32 %v1152, %v1164
        %v1173 = vadd.f32 %v1153, %v1164
        %v1174 = vadd.f32 %v1154, %v1164
        %v1175 = vadd.f32 %v1155, %v1164
        %v1176 = vadd.f32 %v1156, %v1164
        %v1177 = vadd.f32 %v1157, %v1164
        %v1178 = vadd.f32 %v1158, %v1164
        %v1179 = vadd.f32 %v1159, %v1164
        %v1180 = vadd.f32 %v1160, %v1164
        %1181 = vst [vmem:[%s191] sm:$0xff] %v1165
        %1182 = vst [vmem:[%s191 + $0x8] sm:$0xff] %v1166
        %1183 = vst [vmem:[%s191 + $0x10] sm:$0xff] %v1167
        %1184 = vst [vmem:[%s191 + $0x18] sm:$0xff] %v1168
        %1185 = vst [vmem:[%s191 + $0x20] sm:$0xff] %v1169
        %1186 = vst [vmem:[%s191 + $0x28] sm:$0xff] %v1170
        %1187 = vst [vmem:[%s191 + $0x30] sm:$0xff] %v1171
        %1188 = vst [vmem:[%s191 + $0x38] sm:$0xff] %v1172
        %1189 = vst [vmem:[%s191 + $0x40] sm:$0xff] %v1173
        %1190 = vst [vmem:[%s191 + $0x48] sm:$0xff] %v1174
        %1191 = vst [vmem:[%s191 + $0x50] sm:$0xff] %v1175
        %1192 = vst [vmem:[%s191 + $0x58] sm:$0xff] %v1176
        %1193 = vst [vmem:[%s191 + $0x60] sm:$0xff] %v1177
        %1194 = vst [vmem:[%s191 + $0x68] sm:$0xff] %v1178
        %1195 = vst [vmem:[%s191 + $0x70] sm:$0xff] %v1179
        %1196 = vst [vmem:[%s191 + $0x78] sm:$0xff] %v1180
        %s1197 = sand.u32 %s115, 1
        %s1198 = scalar_lea.sflag [#allocation3], %s1197
        %s1199 = sand.u32 %s115, 1
        %s1200 = smul.addr %s1199, 128
        %s1201 = scalar_lea.vmem [#allocation2], %s1200
        // Predicated region
        $region37: #{encoder_forward.3} parent=35 // pred_check
          %p1202 = pneg %p125
        $region38: #{encoder_forward.3} parent=35 // pred_check_branch
          %1204 = sbr.rel (%p1202) target = $region40
        $region39: #{encoder_forward.3} parent=35 // pred_region
          %s1205 = smul.u32 16, %s18
          %s1207 = ssub.s32 2048, 2048
          %1208 = vsyncadd %s1198, %s1207
          %s1209 = smul.addr %s1205, 128
          %s1210 = scalar_lea.hbm %s4, %s1209
          %s1211 = sshll.u32 %s1201, 4
          %s1212 = int_to_ptr.vmem [resolvable:$true] %s1211
          %1217 = dma.vmem_to_hbm [thread:$0]  %s1212, 2048, %s1210, %s1198, 128, 128, 8
        $region40: #{encoder_forward.3} parent=35 // pred_fallthru
          _
      $region36: #{encoder_forward.3} parent=5 // pred_fallthru
        _
      %p1218 = scmp.le.s32.totalorder 2, %s13
      // Predicated region
      $region41: #{encoder_forward.3} parent=5 // pred_check
        %p1219 = pneg %p1218
      $region42: #{encoder_forward.3} parent=5 // pred_check_branch
        %1221 = sbr.rel (%p1219) target = $region44
      $region43: #{encoder_forward.3} parent=5 // pred_region
        %s1222 = ssub.s32 %s13, 2
        // Predicated region
        $region45: #{encoder_forward.3} parent=43 // pred_check
          %p1223 = pneg %p131
        $region46: #{encoder_forward.3} parent=43 // pred_check_branch
          %1225 = sbr.rel (%p1223) target = $region48
        $region47: #{encoder_forward.3} parent=43 // pred_region
          %s1226 = sand.u32 %s116, 1
          %s1227 = scalar_lea.sflag [#allocation3], %s1226
          %s1228 = sand.u32 %s116, 1
          %s1229 = smul.addr %s1228, 128
          %s1230 = scalar_lea.vmem [#allocation2], %s1229
          %1231 = dma.done %s1227, 2048
        $region48: #{encoder_forward.3} parent=43 // pred_fallthru
          _
      $region44: #{encoder_forward.3} parent=5 // pred_fallthru
        _
    $region6: #{encoder_forward.3} parent=1 // loop_footer
      %s17 = sadd.s32 1, %s13
    $region7: #{encoder_forward.3} parent=1 // loop_footer_branch
      %12 = sbr.rel target = $region3
    $region8: #{encoder_forward.3} parent=1 // loop_exit
      _
    %1232 = vsyncpa [#allocation3], 1
    %s1233 = scalar_lea.sflag [#allocation3], 1
    %1234 = vsyncpa %s1233, 1

</llo_original>
